<compile_context>
chip_gen: v5e
topology: v5e:2x2
jax: 0.10.0
libtpu: 0.0.40
codegen_flags: <defaults>
</compile_context>

<pallas_src>
import jax
import jax.numpy as jnp
from jax.experimental import pallas as pl
from jax.experimental.pallas import tpu as pltpu

EPS = 1e-5  # BatchNorm2d eps


def _pick_tile_n():
    """Per-chip output-channel tile width (see perf review)."""
    try:
        kind = jax.devices()[0].device_kind.lower()
    except Exception:
        return 256
    if "v5" in kind:
        return 128     # v5e: 128-wide MXU, weight-DMA-bound -> keep C_pad minimal (1408)
    if "v6" in kind:
        return 512     # v6e: 3 big steps, fills 256-wide MXU, wide unmasked stores
    return 256         # v7x / default: even tile count splits cleanly over 2 TCs


def _round_up(x, m):
    return ((x + m - 1) // m) * m


def _pad_axis(x, target, axis):
    pad = target - x.shape[axis]
    if pad == 0:
        return x
    widths = [(0, 0)] * x.ndim
    widths[axis] = (0, pad)
    return jnp.pad(x, widths)


def prepare_params(w42, b42, w43, gamma, beta, tile_n):
    """One-time (model-init) parameter preparation, hoisted off the per-call path.

    Returns:
      w42_m   : [C_se, C_pad]           f32   SE 1x1-conv weight (transposed, padded)
      b42_p   : [1, C_pad]              f32   SE bias (padded)
      w43_blk : [num_tiles, C_pad, tile_n] bf16  conv43 weight in contiguous per-tile slabs
      gamma_p : [1, C_pad]              f32   BN weight (padded lanes -> 0)
      beta_p  : [1, C_pad]              f32   BN bias   (padded lanes -> 0)
    """
    C = w43.shape[0]
    C_pad = _round_up(C, tile_n)
    num_tiles = C_pad // tile_n

    w42_m = _pad_axis(w42[:, :, 0, 0].T, C_pad, 1)                       # [C_se, C_pad]
    b42_p = _pad_axis(b42.reshape(1, C), C_pad, 1)                       # [1, C_pad]

    # conv43: [C_out, C_in, 1, 1] -> matmul layout [K=C_in, N=C_out], pad both dims,
    # cast to bf16, then block the N axis into contiguous per-tile slabs so each grid
    # step's weight DMA is one contiguous read.
    w43_m = _pad_axis(_pad_axis(w43[:, :, 0, 0].T, C_pad, 0), C_pad, 1)  # [C_pad, C_pad]
    w43_m = w43_m.astype(jnp.bfloat16)
    w43_blk = w43_m.reshape(C_pad, num_tiles, tile_n).transpose(1, 0, 2)  # [T, C_pad, tile_n]

    gamma_p = _pad_axis(gamma.reshape(1, C), C_pad, 1)
    beta_p = _pad_axis(beta.reshape(1, C), C_pad, 1)
    return w42_m, b42_p, w43_blk, gamma_p, beta_p


def fused_kernel(s_ref, x127_ref, w43_ref, gamma_ref, beta_ref, x121_ref, o_ref):
    # --- excitation: broadcast the (precomputed) SE gate over all spatial rows.
    #     Cast to bf16 so the 1x1 conv runs on the native bf16 MXU path (f32 accumulate).
    y = (x127_ref[...] * s_ref[...]).astype(w43_ref.dtype)              # [HW, C_pad] bf16

    # --- conv2d43 (1x1, no bias) == matmul against this tile's contiguous weight slab
    z = jnp.dot(y, w43_ref[0], preferred_element_type=jnp.float32)      # [HW, tile_n] f32

    # --- BatchNorm2d (training mode): per-channel batch stats over HW rows,
    #     two-pass (centered) variance for numerical robustness.
    inv_hw = 1.0 / x127_ref.shape[0]                                    # static python float
    mean = jnp.sum(z, axis=0, keepdims=True) * inv_hw                   # [1, tile_n]
    d = z - mean
    var = jnp.sum(d * d, axis=0, keepdims=True) * inv_hw                # biased variance
    scale = gamma_ref[...] * jax.lax.rsqrt(var + EPS)                   # padded lanes: gamma=0 -> 0

    # --- residual add + ReLU
    o_ref[...] = jnp.maximum(x121_ref[...] + d * scale + beta_ref[...], 0.0)


def fused_forward(x130, x127, x121, w42_m, b42_p, w43_blk, gamma_p, beta_p):
    """Activation inputs follow PyTorch NCHW; parameters come pre-prepared (prepare_params)."""
    N, C, H, W = x127.shape
    assert N == 1, "SE broadcast / BN batch stats formulated for batch size 1 (as in module M)"
    C_se = x130.shape[1]
    HW = N * H * W
    num_tiles, C_pad, tile_n = w43_blk.shape

    # tiny SE branch (conv2d42 on a 1x1 map + sigmoid), computed once in plain JAX:
    # a [1,C_se]x[C_se,C_pad] matvec is negligible, and hoisting it avoids redoing it
    # full-width on every output-channel tile inside the kernel.
    s = jax.nn.sigmoid(x130.reshape(N, C_se) @ w42_m + b42_p)            # [1, C_pad] f32

    # TODO(synk): keep the surrounding graph channels-last (NHWC) to kill these
    # NCHW<->NHWC transposes + channel pads around the kernel.
    x127_f = _pad_axis(x127.transpose(0, 2, 3, 1).reshape(HW, C), C_pad, 1)  # [HW, C_pad] f32
    x121_f = _pad_axis(x121.transpose(0, 2, 3, 1).reshape(HW, C), C_pad, 1)  # [HW, C_pad] f32

    out_flat = pl.pallas_call(
        fused_kernel,
        out_shape=jax.ShapeDtypeStruct((HW, C_pad), jnp.float32),
        grid=(num_tiles,),
        in_specs=[
            pl.BlockSpec((1, C_pad), lambda j: (0, 0)),           # s      (whole, resident)
            pl.BlockSpec((HW, C_pad), lambda j: (0, 0)),          # x127   (whole, resident)
            pl.BlockSpec((1, C_pad, tile_n), lambda j: (j, 0, 0)),  # w43 contiguous slab (bf16)
            pl.BlockSpec((1, tile_n), lambda j: (0, j)),          # gamma tile
            pl.BlockSpec((1, tile_n), lambda j: (0, j)),          # beta tile
            pl.BlockSpec((HW, tile_n), lambda j: (0, j)),         # x121 tile
        ],
        out_specs=pl.BlockSpec((HW, tile_n), lambda j: (0, j)),
        compiler_params=pltpu.CompilerParams(
            dimension_semantics=("parallel",),                    # megacore: shard tiles over TCs
            vmem_limit_bytes=32 * 1024 * 1024,
        ),
    )(s, x127_f, w43_blk, gamma_p, beta_p, x121_f)

    out = out_flat[:, :C]                                         # drop padded channels
    return out.reshape(N, H, W, C).transpose(0, 3, 1, 2)          # back to NCHW


def reference(x130, x127, x121, w42, b42, w43, gamma, beta):
    """Pure-JAX NCHW reference matching PyTorch semantics (BN in training mode).
    conv43 operands are cast to bf16 (f32 accumulation) to mirror the kernel's MXU path."""
    dn = ('NCHW', 'OIHW', 'NCHW')
    x131 = jax.lax.conv_general_dilated(x130, w42, (1, 1), 'VALID', dimension_numbers=dn)
    x131 = x131 + b42[None, :, None, None]
    x132 = jax.nn.sigmoid(x131)
    x133 = x132 * x127
    x134 = jax.lax.conv_general_dilated(
        x133.astype(jnp.bfloat16), w43.astype(jnp.bfloat16), (1, 1), 'VALID',
        dimension_numbers=dn, preferred_element_type=jnp.float32)
    mean = jnp.mean(x134, axis=(0, 2, 3), keepdims=True)
    var = jnp.var(x134, axis=(0, 2, 3), keepdims=True)            # biased, like BN training mode
    x135 = (x134 - mean) * jax.lax.rsqrt(var + EPS)
    x135 = x135 * gamma[None, :, None, None] + beta[None, :, None, None]
    return jnp.maximum(x121 + x135, 0.0)


if __name__ == "__main__":
    # Small shapes consistent with the module structure (1392 -> 348, 174 -> 44).
    # 348 is deliberately NOT a multiple of the tile so the channel-padding path is
    # exercised regardless of which per-chip tile width is selected.
    N, C, C_se, H, W = 1, 348, 44, 14, 14
    TILE_N = _pick_tile_n()

    key = jax.random.PRNGKey(0)
    k = jax.random.split(key, 8)
    x121 = jax.random.normal(k[0], (N, C, H, W), jnp.float32)
    x127 = jax.random.normal(k[1], (N, C, H, W), jnp.float32)
    x130 = jax.random.normal(k[2], (N, C_se, 1, 1), jnp.float32)

    # deterministic parameter init (shapes per module __init__)
    w42 = jax.random.normal(k[3], (C, C_se, 1, 1), jnp.float32) * 0.1     # conv2d42.weight
    b42 = jax.random.normal(k[4], (C,), jnp.float32) * 0.1                # conv2d42.bias
    w43 = jax.random.normal(k[5], (C, C, 1, 1), jnp.float32) * 0.05       # conv2d43.weight
    gamma = 1.0 + 0.1 * jax.random.normal(k[6], (C,), jnp.float32)        # BN weight
    beta = 0.1 * jax.random.normal(k[7], (C,), jnp.float32)               # BN bias

    # One-time parameter prep (hoisted out of the per-call jitted path).
    w42_m, b42_p, w43_blk, gamma_p, beta_p = prepare_params(w42, b42, w43, gamma, beta, TILE_N)
    jax.block_until_ready(w43_blk)

    fused = jax.jit(fused_forward)
    out = fused(x130, x127, x121, w42_m, b42_p, w43_blk, gamma_p, beta_p)
    jax.block_until_ready(out)

    ref = reference(x130, x127, x121, w42, b42, w43, gamma, beta)
    assert out.shape == (N, C, H, W)
    max_err = jnp.max(jnp.abs(out - ref))
    assert jnp.allclose(out, ref, atol=1e-2, rtol=1e-2), f"max abs err = {max_err}"

    print("KERNEL_OK")
</pallas_src>

<mosaic_0001>
module attributes {stable_mosaic.version = 11 : i64} {
  func.func @fused_kernel(%arg0: i32, %arg1: memref<1x512xf32, #tpu.memory_space<vmem>>, %arg2: memref<196x512xf32, #tpu.memory_space<vmem>>, %arg3: memref<1x512x256xbf16, #tpu.memory_space<vmem>>, %arg4: memref<1x256xf32, #tpu.memory_space<vmem>>, %arg5: memref<1x256xf32, #tpu.memory_space<vmem>>, %arg6: memref<196x256xf32, #tpu.memory_space<vmem>>, %arg7: memref<196x256xf32, #tpu.memory_space<vmem>>) attributes {dimension_semantics = [#tpu.dimension_semantics<parallel>], iteration_bounds = array<i64: 2>, scalar_prefetch = 0 : i64, scratch_operands = 0 : i64, tpu.core_type = #tpu.core_type<tc>, window_params = [{pipeline_mode = #tpu.pipeline_mode<synchronous>, transform_indices = @transform_0, window_bounds = array<i64: 1, 512>}, {pipeline_mode = #tpu.pipeline_mode<synchronous>, transform_indices = @transform_1, window_bounds = array<i64: 196, 512>}, {transform_indices = @transform_2, window_bounds = array<i64: 1, 512, 256>}, {transform_indices = @transform_3, window_bounds = array<i64: 1, 256>}, {transform_indices = @transform_4, window_bounds = array<i64: 1, 256>}, {transform_indices = @transform_5, window_bounds = array<i64: 196, 256>}, {transform_indices = @transform_6, window_bounds = array<i64: 196, 256>}]} {
    %c0 = arith.constant 0 : index
    %c0_0 = arith.constant 0 : index
    %0 = vector.load %arg2[%c0, %c0_0] : memref<196x512xf32, #tpu.memory_space<vmem>>, vector<196x512xf32>
    %c0_1 = arith.constant 0 : index
    %c0_2 = arith.constant 0 : index
    %1 = vector.load %arg1[%c0_1, %c0_2] : memref<1x512xf32, #tpu.memory_space<vmem>>, vector<1x512xf32>
    %2 = vector.broadcast %1 : vector<1x512xf32> to vector<196x512xf32>
    %3 = arith.mulf %0, %2 : vector<196x512xf32>
    %4 = arith.truncf %3 : vector<196x512xf32> to vector<196x512xbf16>
    %c0_3 = arith.constant 0 : index
    %c0_4 = arith.constant 0 : index
    %c0_5 = arith.constant 0 : index
    %5 = vector.load %arg3[%c0_3, %c0_4, %c0_5] : memref<1x512x256xbf16, #tpu.memory_space<vmem>>, vector<1x512x256xbf16>
    %6 = vector.shape_cast %5 : vector<1x512x256xbf16> to vector<512x256xbf16>
    %cst = arith.constant dense<0.000000e+00> : vector<196x256xf32>
    %7 = tpu.matmul %4, %6, %cst {dimension_numbers = #tpu.dot_dimension_numbers<[1], [0], [0], [1], [0, 0, 1, 1], [], []>} : vector<196x512xbf16>, vector<512x256xbf16>, vector<196x256xf32> -> vector<196x256xf32>
    %cst_6 = arith.constant dense<0.000000e+00> : vector<256xf32>
    %8 = vector.multi_reduction <add>, %7, %cst_6 [0] : vector<196x256xf32> to vector<256xf32>
    %9 = vector.shape_cast %8 : vector<256xf32> to vector<1x256xf32>
    %cst_7 = arith.constant 0.00510204071 : f32
    %10 = vector.broadcast %cst_7 : f32 to vector<1x256xf32>
    %11 = arith.mulf %9, %10 : vector<1x256xf32>
    %12 = vector.broadcast %11 : vector<1x256xf32> to vector<196x256xf32>
    %13 = arith.subf %7, %12 : vector<196x256xf32>
    %14 = arith.mulf %13, %13 : vector<196x256xf32>
    %cst_8 = arith.constant dense<0.000000e+00> : vector<256xf32>
    %15 = vector.multi_reduction <add>, %14, %cst_8 [0] : vector<196x256xf32> to vector<256xf32>
    %16 = vector.shape_cast %15 : vector<256xf32> to vector<1x256xf32>
    %cst_9 = arith.constant 0.00510204071 : f32
    %17 = vector.broadcast %cst_9 : f32 to vector<1x256xf32>
    %18 = arith.mulf %16, %17 : vector<1x256xf32>
    %c0_10 = arith.constant 0 : index
    %c0_11 = arith.constant 0 : index
    %19 = vector.load %arg4[%c0_10, %c0_11] : memref<1x256xf32, #tpu.memory_space<vmem>>, vector<1x256xf32>
    %cst_12 = arith.constant 9.99999974E-6 : f32
    %20 = vector.broadcast %cst_12 : f32 to vector<1x256xf32>
    %21 = arith.addf %18, %20 : vector<1x256xf32>
    %22 = math.rsqrt %21 : vector<1x256xf32>
    %23 = arith.mulf %19, %22 : vector<1x256xf32>
    %c0_13 = arith.constant 0 : index
    %c0_14 = arith.constant 0 : index
    %24 = vector.load %arg6[%c0_13, %c0_14] : memref<196x256xf32, #tpu.memory_space<vmem>>, vector<196x256xf32>
    %25 = vector.broadcast %23 : vector<1x256xf32> to vector<196x256xf32>
    %26 = arith.mulf %13, %25 : vector<196x256xf32>
    %27 = arith.addf %24, %26 : vector<196x256xf32>
    %c0_15 = arith.constant 0 : index
    %c0_16 = arith.constant 0 : index
    %28 = vector.load %arg5[%c0_15, %c0_16] : memref<1x256xf32, #tpu.memory_space<vmem>>, vector<1x256xf32>
    %29 = vector.broadcast %28 : vector<1x256xf32> to vector<196x256xf32>
    %30 = arith.addf %27, %29 : vector<196x256xf32>
    %cst_17 = arith.constant 0.000000e+00 : f32
    %31 = vector.broadcast %cst_17 : f32 to vector<196x256xf32>
    %32 = arith.maximumf %30, %31 : vector<196x256xf32>
    %c0_18 = arith.constant 0 : index
    %c0_19 = arith.constant 0 : index
    %33 = vector.load %arg7[%c0_18, %c0_19] : memref<196x256xf32, #tpu.memory_space<vmem>>, vector<196x256xf32>
    tpu.vector_store %arg7[%c0_18, %c0_19], %32 {strides = array<i32>} : memref<196x256xf32, #tpu.memory_space<vmem>>, vector<196x256xf32>,
    return
  }
  func.func @transform_0(%arg0: i32) -> (i32, i32) {
    %c0_i32 = arith.constant 0 : i32
    %c0_i32_0 = arith.constant 0 : i32
    %c0_i32_1 = arith.constant 0 : i32
    return %c0_i32, %c0_i32_0 : i32, i32
  }
  func.func @transform_1(%arg0: i32) -> (i32, i32) {
    %c0_i32 = arith.constant 0 : i32
    %c0_i32_0 = arith.constant 0 : i32
    %c0_i32_1 = arith.constant 0 : i32
    return %c0_i32, %c0_i32_0 : i32, i32
  }
  func.func @transform_2(%arg0: i32) -> (i32, i32, i32) {
    %c0_i32 = arith.constant 0 : i32
    %c0_i32_0 = arith.constant 0 : i32
    %c0_i32_1 = arith.constant 0 : i32
    return %arg0, %c0_i32, %c0_i32_0 : i32, i32, i32
  }
  func.func @transform_3(%arg0: i32) -> (i32, i32) {
    %c0_i32 = arith.constant 0 : i32
    %c0_i32_0 = arith.constant 0 : i32
    return %c0_i32, %arg0 : i32, i32
  }
  func.func @transform_4(%arg0: i32) -> (i32, i32) {
    %c0_i32 = arith.constant 0 : i32
    %c0_i32_0 = arith.constant 0 : i32
    return %c0_i32, %arg0 : i32, i32
  }
  func.func @transform_5(%arg0: i32) -> (i32, i32) {
    %c0_i32 = arith.constant 0 : i32
    %c0_i32_0 = arith.constant 0 : i32
    return %c0_i32, %arg0 : i32, i32
  }
  func.func @transform_6(%arg0: i32) -> (i32, i32) {
    %c0_i32 = arith.constant 0 : i32
    %c0_i32_0 = arith.constant 0 : i32
    return %c0_i32, %arg0 : i32, i32
  }
}

</mosaic_0001>

<llo_original>
// kernel: fused_forward.1
$region0: #{fused_forward.1}
  #allocation0 [shape = 'u32[]', space=smem, size = 0x4, offset = 0x4, fixed_abs, tag = 'smem constant byte address 0x4 - core index']
  #allocation1 [shape = 'u32[72,128]{1,0:T(1,128)}', space=vmem, size = 0x9000, scoped, tag = 'internal scratch']
  %s0 = inlined_call_operand.vmem [shape: f32[1,512], index: 0, kind: input, shape index: {}]
  %s1 = inlined_call_operand.vmem [shape: f32[196,512], index: 1, kind: input, shape index: {}]
  %s2 = inlined_call_operand.vmem [shape: bf16[2,512,256], index: 2, kind: input, shape index: {}]
  %s3 = inlined_call_operand.vmem [shape: f32[1,512], index: 3, kind: input, shape index: {}]
  %s4 = inlined_call_operand.vmem [shape: f32[1,512], index: 4, kind: input, shape index: {}]
  %s5 = inlined_call_operand.vmem [shape: f32[196,512], index: 5, kind: input, shape index: {}]
  %s6 = inlined_call_operand.vmem [shape: f32[196,512], index: 6, kind: output, shape index: {}]
  %s7 = sld [smem:[#allocation0]]
  $region99: #{fused_forward.1} parent=0
    _
  %s9 = ssub.s32 1, %s7
  %s10 = scalar_select 0, %s9, %s7
  $region1: #{fused_forward.1} parent=0
    #allocation2 [shape = 'u8[409600]{0}', space=vmem, size = 0x64000, scoped, tag = 'input window, operand 5']
    #allocation3 [shape = 'u8[409600]{0}', space=vmem, size = 0x64000, scoped, tag = 'output window, operand 0']
    loop: start=0, step=1, limit=4
    $region2: #{fused_forward.1} parent=1 // loop_pre_header
      _
    $region3: #{fused_forward.1} parent=1 // loop_header
      %s12 = sphi 0, %s16
      %p13 = scmp.ge.s32.totalorder %s12, 4
      %s20 = sphi 0, %s20
      %s22 = sphi 0, %s20
      %s23 = sphi 0, %s22
      %s37 = sphi 0, %s23
      %s41 = sphi 0, %s41
      %s43 = sphi 0, %s41
      %s44 = sphi 0, %s43
      %s58 = sphi 0, %s44
      %s64 = sphi 0, %s66
      %s67 = sphi 0, %s64
      %s68 = sphi 0, %s67
      %s84 = sphi 0, %s68
      %s90 = sphi 0, %s92
      %s93 = sphi 0, %s90
      %s94 = sphi 0, %s93
      %s110 = sphi 0, %s94
      %s116 = sphi 0, %s118
      %s119 = sphi 0, %s116
      %s120 = sphi 0, %s119
      %s136 = sphi 0, %s120
      %s142 = sphi 0, %s144
      %s145 = sphi 0, %s142
      %s146 = sphi 0, %s145
      %s162 = sphi 0, %s146
      %s168 = sphi 0, %s170
      %s171 = sphi 0, %s168
      %s172 = sphi 0, %s171
      %s188 = sphi 0, %s172
    $region4: #{fused_forward.1} parent=1 // loop_header_branch
      %15 = sbr.rel (%p13) target = $region8
    $region5: #{fused_forward.1} parent=1 // loop_body
      %s17 = ssub.s32 %s12, 1
      %s18 = ssub.s32 %s12, 2
      %s19 = sadd.s32 %s12, 1
      %s21 = sadd.s32 %s20, 1
      %p24 = scmp.eq.s32.totalorder %s12, 1
      %p25 = scmp.ne.s32.totalorder %s20, %s22
      %p26 = scmp.eq.s32.totalorder %s12, 0
      %p27 = por %p25, %p26
      %p28 = scmp.ne.s32.totalorder %s20, %s22
      %p29 = scmp.eq.s32.totalorder %s17, 1
      %p30 = por %p28, %p29
      %p31 = scmp.ne.s32.totalorder %s22, %s23
      %p32 = scmp.eq.s32.totalorder %s17, 0
      %p33 = por %p31, %p32
      %p34 = scmp.ne.s32.totalorder %s22, %s23
      %p35 = scmp.eq.s32.totalorder %s18, 1
      %p36 = por %p34, %p35
      %p38 = scmp.ne.s32.totalorder %s23, %s37
      %p39 = scmp.eq.s32.totalorder %s18, 0
      %p40 = por %p38, %p39
      %s42 = sadd.s32 %s41, 1
      %p45 = scmp.eq.s32.totalorder %s12, 1
      %p46 = scmp.ne.s32.totalorder %s41, %s43
      %p47 = scmp.eq.s32.totalorder %s12, 0
      %p48 = por %p46, %p47
      %p49 = scmp.ne.s32.totalorder %s41, %s43
      %p50 = scmp.eq.s32.totalorder %s17, 1
      %p51 = por %p49, %p50
      %p52 = scmp.ne.s32.totalorder %s43, %s44
      %p53 = scmp.eq.s32.totalorder %s17, 0
      %p54 = por %p52, %p53
      %p55 = scmp.ne.s32.totalorder %s43, %s44
      %p56 = scmp.eq.s32.totalorder %s18, 1
      %p57 = por %p55, %p56
      %p59 = scmp.ne.s32.totalorder %s44, %s58
      %p60 = scmp.eq.s32.totalorder %s18, 0
      %p61 = por %p59, %p60
      %s62 = ssub.s32 %s12, %s19
      %p63 = scmp.eq.s32.totalorder %s62, 0
      %s65 = sadd.s32 %s64, 1
      %s66 = scalar_select %p63, %s64, %s65
      %p69 = pneg %p63
      %p70 = scmp.eq.s32.totalorder %s12, 1
      %p71 = por %p69, %p70
      %p72 = scmp.ne.s32.totalorder %s64, %s67
      %p73 = scmp.eq.s32.totalorder %s12, 0
      %p74 = por %p72, %p73
      %p75 = scmp.ne.s32.totalorder %s64, %s67
      %p76 = scmp.eq.s32.totalorder %s17, 1
      %p77 = por %p75, %p76
      %p78 = scmp.ne.s32.totalorder %s67, %s68
      %p79 = scmp.eq.s32.totalorder %s17, 0
      %p80 = por %p78, %p79
      %p81 = scmp.ne.s32.totalorder %s67, %s68
      %p82 = scmp.eq.s32.totalorder %s18, 1
      %p83 = por %p81, %p82
      %p85 = scmp.ne.s32.totalorder %s68, %s84
      %p86 = scmp.eq.s32.totalorder %s18, 0
      %p87 = por %p85, %p86
      %s88 = ssub.s32 %s12, %s19
      %p89 = scmp.eq.s32.totalorder %s88, 0
      %s91 = sadd.s32 %s90, 1
      %s92 = scalar_select %p89, %s90, %s91
      %p95 = pneg %p89
      %p96 = scmp.eq.s32.totalorder %s12, 1
      %p97 = por %p95, %p96
      %p98 = scmp.ne.s32.totalorder %s90, %s93
      %p99 = scmp.eq.s32.totalorder %s12, 0
      %p100 = por %p98, %p99
      %p101 = scmp.ne.s32.totalorder %s90, %s93
      %p102 = scmp.eq.s32.totalorder %s17, 1
      %p103 = por %p101, %p102
      %p104 = scmp.ne.s32.totalorder %s93, %s94
      %p105 = scmp.eq.s32.totalorder %s17, 0
      %p106 = por %p104, %p105
      %p107 = scmp.ne.s32.totalorder %s93, %s94
      %p108 = scmp.eq.s32.totalorder %s18, 1
      %p109 = por %p107, %p108
      %p111 = scmp.ne.s32.totalorder %s94, %s110
      %p112 = scmp.eq.s32.totalorder %s18, 0
      %p113 = por %p111, %p112
      %s114 = ssub.s32 %s12, %s19
      %p115 = scmp.eq.s32.totalorder %s114, 0
      %s117 = sadd.s32 %s116, 1
      %s118 = scalar_select %p115, %s116, %s117
      %p121 = pneg %p115
      %p122 = scmp.eq.s32.totalorder %s12, 1
      %p123 = por %p121, %p122
      %p124 = scmp.ne.s32.totalorder %s116, %s119
      %p125 = scmp.eq.s32.totalorder %s12, 0
      %p126 = por %p124, %p125
      %p127 = scmp.ne.s32.totalorder %s116, %s119
      %p128 = scmp.eq.s32.totalorder %s17, 1
      %p129 = por %p127, %p128
      %p130 = scmp.ne.s32.totalorder %s119, %s120
      %p131 = scmp.eq.s32.totalorder %s17, 0
      %p132 = por %p130, %p131
      %p133 = scmp.ne.s32.totalorder %s119, %s120
      %p134 = scmp.eq.s32.totalorder %s18, 1
      %p135 = por %p133, %p134
      %p137 = scmp.ne.s32.totalorder %s120, %s136
      %p138 = scmp.eq.s32.totalorder %s18, 0
      %p139 = por %p137, %p138
      %s140 = ssub.s32 %s12, %s19
      %p141 = scmp.eq.s32.totalorder %s140, 0
      %s143 = sadd.s32 %s142, 1
      %s144 = scalar_select %p141, %s142, %s143
      %p147 = pneg %p141
      %p148 = scmp.eq.s32.totalorder %s12, 1
      %p149 = por %p147, %p148
      %p150 = scmp.ne.s32.totalorder %s142, %s145
      %p151 = scmp.eq.s32.totalorder %s12, 0
      %p152 = por %p150, %p151
      %p153 = scmp.ne.s32.totalorder %s142, %s145
      %p154 = scmp.eq.s32.totalorder %s17, 1
      %p155 = por %p153, %p154
      %p156 = scmp.ne.s32.totalorder %s145, %s146
      %p157 = scmp.eq.s32.totalorder %s17, 0
      %p158 = por %p156, %p157
      %p159 = scmp.ne.s32.totalorder %s145, %s146
      %p160 = scmp.eq.s32.totalorder %s18, 1
      %p161 = por %p159, %p160
      %p163 = scmp.ne.s32.totalorder %s146, %s162
      %p164 = scmp.eq.s32.totalorder %s18, 0
      %p165 = por %p163, %p164
      %s166 = ssub.s32 %s12, %s19
      %p167 = scmp.eq.s32.totalorder %s166, 0
      %s169 = sadd.s32 %s168, 1
      %s170 = scalar_select %p167, %s168, %s169
      %p173 = pneg %p167
      %p174 = scmp.eq.s32.totalorder %s12, 1
      %p175 = por %p173, %p174
      %p176 = scmp.ne.s32.totalorder %s168, %s171
      %p177 = scmp.eq.s32.totalorder %s12, 0
      %p178 = por %p176, %p177
      %p179 = scmp.ne.s32.totalorder %s168, %s171
      %p180 = scmp.eq.s32.totalorder %s17, 1
      %p181 = por %p179, %p180
      %p182 = scmp.ne.s32.totalorder %s171, %s172
      %p183 = scmp.eq.s32.totalorder %s17, 0
      %p184 = por %p182, %p183
      %p185 = scmp.ne.s32.totalorder %s171, %s172
      %p186 = scmp.eq.s32.totalorder %s18, 1
      %p187 = por %p185, %p186
      %p189 = scmp.ne.s32.totalorder %s172, %s188
      %p190 = scmp.eq.s32.totalorder %s18, 0
      %p191 = por %p189, %p190
      %p192 = scmp.le.s32.totalorder 1, %s12
      %p193 = scmp.lt.s32.totalorder %s12, 3
      %p194 = pnand %p192, %p193
      %p195 = pneg %p194
      // Predicated region
      $region9: #{fused_forward.1} parent=5 // pred_check
        _
      $region10: #{fused_forward.1} parent=5 // pred_check_branch
        %197 = sbr.rel (%p194) target = $region12
      $region11: #{fused_forward.1} parent=5 // pred_region
        %s198 = ssub.s32 %s12, 1
        // Predicated region
        $region13: #{fused_forward.1} parent=11 // pred_check
          %p199 = pneg %p33
        $region14: #{fused_forward.1} parent=11 // pred_check_branch
          %201 = sbr.rel (%p199) target = $region16
        $region15: #{fused_forward.1} parent=11 // pred_region
          _
        $region16: #{fused_forward.1} parent=11 // pred_fallthru
          _
        // Predicated region
        $region17: #{fused_forward.1} parent=11 // pred_check
          %p202 = pneg %p54
        $region18: #{fused_forward.1} parent=11 // pred_check_branch
          %204 = sbr.rel (%p202) target = $region20
        $region19: #{fused_forward.1} parent=11 // pred_region
          _
        $region20: #{fused_forward.1} parent=11 // pred_fallthru
          _
      $region12: #{fused_forward.1} parent=5 // pred_fallthru
        _
      %p205 = scmp.lt.s32.totalorder %s12, 2
      // Predicated region
      $region21: #{fused_forward.1} parent=5 // pred_check
        %p206 = pneg %p205
      $region22: #{fused_forward.1} parent=5 // pred_check_branch
        %208 = sbr.rel (%p206) target = $region24
      $region23: #{fused_forward.1} parent=5 // pred_region
        // Predicated region
        $region25: #{fused_forward.1} parent=23 // pred_check
          %p209 = pneg %p74
        $region26: #{fused_forward.1} parent=23 // pred_check_branch
          %211 = sbr.rel (%p209) target = $region28
        $region27: #{fused_forward.1} parent=23 // pred_region
          %p212 = scmp.lt.s32.totalorder %s12, 1
          %s213 = scalar_select %p212, %s12, 1
          %s214 = smul.addr %s213, 128
          %s215 = smul.addr %s214, 4
          %s216 = scalar_lea.vmem %s2, %s215
        $region28: #{fused_forward.1} parent=23 // pred_fallthru
          _
        // Predicated region
        $region29: #{fused_forward.1} parent=23 // pred_check
          %p217 = pneg %p100
        $region30: #{fused_forward.1} parent=23 // pred_check_branch
          %219 = sbr.rel (%p217) target = $region32
        $region31: #{fused_forward.1} parent=23 // pred_region
          %s220 = smul.u32 2, %s12
          %p221 = scmp.lt.s32.totalorder %s220, 3
          %s222 = scalar_select %p221, %s220, 3
          %s223 = scalar_lea.vmem %s3, %s222
          %s224 = smul.u32 2, %s12
        $region32: #{fused_forward.1} parent=23 // pred_fallthru
          _
        // Predicated region
        $region33: #{fused_forward.1} parent=23 // pred_check
          %p225 = pneg %p126
        $region34: #{fused_forward.1} parent=23 // pred_check_branch
          %227 = sbr.rel (%p225) target = $region36
        $region35: #{fused_forward.1} parent=23 // pred_region
          %s228 = smul.u32 2, %s12
          %p229 = scmp.lt.s32.totalorder %s228, 3
          %s230 = scalar_select %p229, %s228, 3
          %s231 = scalar_lea.vmem %s4, %s230
          %s232 = smul.u32 2, %s12
        $region36: #{fused_forward.1} parent=23 // pred_fallthru
          _
        // Predicated region
        $region37: #{fused_forward.1} parent=23 // pred_check
          %p233 = pneg %p152
        $region38: #{fused_forward.1} parent=23 // pred_check_branch
          %235 = sbr.rel (%p233) target = $region40
        $region39: #{fused_forward.1} parent=23 // pred_region
          %s236 = sand.u32 %s142, 1
          %s237 = sand.u32 %s142, 1
          %s238 = smul.addr %s237, 400
          %s239 = scalar_lea.vmem [#allocation2], %s238
          %s240 = smul.u32 2, %s12
          %s241 = smul.addr %s240, 8
          %s242 = scalar_lea.vmem %s5, %s241
          // Predicated region
          $region41: #{fused_forward.1} parent=39 // pred_check
            _
          $region42: #{fused_forward.1} parent=39 // pred_check_branch
            %244 = sbr.rel (0) target = $region44
          $region43: #{fused_forward.1} parent=39 // pred_region
            // Predicated region
            $region45: #{fused_forward.1} parent=43 // pred_check
              _
            $region46: #{fused_forward.1} parent=43 // pred_check_branch
              %246 = sbr.rel (0) target = $region48
            $region47: #{fused_forward.1} parent=43 // pred_region
              loop: start=0, step=1, limit=1
              $region49: #{fused_forward.1} parent=47 // loop_pre_header
                _
              $region50: #{fused_forward.1} parent=47 // loop_header
                %s248 = sphi 0, %s252
                %p249 = scmp.ge.s32.totalorder %s248, 1
                %s253 = sphi %s242, %s242
                %s254 = sphi %s239, %s239
              $region51: #{fused_forward.1} parent=47 // loop_header_branch
                %251 = sbr.rel (%p249) target = $region55
              $region52: #{fused_forward.1} parent=47 // loop_body
                %v255 = vld [vmem:[%s253] sm:$0xff]
                %256 = vst [vmem:[%s254] sm:$0xff] %v255
                %v257 = vld [vmem:[%s253 + $0x8] sm:$0xff]
                %258 = vst [vmem:[%s254 + $0x8] sm:$0xff] %v257
                %v259 = vld [vmem:[%s253 + $0x20] sm:$0xff]
                %260 = vst [vmem:[%s254 + $0x10] sm:$0xff] %v259
                %v261 = vld [vmem:[%s253 + $0x28] sm:$0xff]
                %262 = vst [vmem:[%s254 + $0x18] sm:$0xff] %v261
                %v263 = vld [vmem:[%s253 + $0x40] sm:$0xff]
                %264 = vst [vmem:[%s254 + $0x20] sm:$0xff] %v263
                %v265 = vld [vmem:[%s253 + $0x48] sm:$0xff]
                %266 = vst [vmem:[%s254 + $0x28] sm:$0xff] %v265
                %v267 = vld [vmem:[%s253 + $0x60] sm:$0xff]
                %268 = vst [vmem:[%s254 + $0x30] sm:$0xff] %v267
                %v269 = vld [vmem:[%s253 + $0x68] sm:$0xff]
                %270 = vst [vmem:[%s254 + $0x38] sm:$0xff] %v269
                %v271 = vld [vmem:[%s253 + $0x80] sm:$0xff]
                %272 = vst [vmem:[%s254 + $0x40] sm:$0xff] %v271
                %v273 = vld [vmem:[%s253 + $0x88] sm:$0xff]
                %274 = vst [vmem:[%s254 + $0x48] sm:$0xff] %v273
                %v275 = vld [vmem:[%s253 + $0xa0] sm:$0xff]
                %276 = vst [vmem:[%s254 + $0x50] sm:$0xff] %v275
                %v277 = vld [vmem:[%s253 + $0xa8] sm:$0xff]
                %278 = vst [vmem:[%s254 + $0x58] sm:$0xff] %v277
                %v279 = vld [vmem:[%s253 + $0xc0] sm:$0xff]
                %280 = vst [vmem:[%s254 + $0x60] sm:$0xff] %v279
                %v281 = vld [vmem:[%s253 + $0xc8] sm:$0xff]
                %282 = vst [vmem:[%s254 + $0x68] sm:$0xff] %v281
                %v283 = vld [vmem:[%s253 + $0xe0] sm:$0xff]
                %284 = vst [vmem:[%s254 + $0x70] sm:$0xff] %v283
                %v285 = vld [vmem:[%s253 + $0xe8] sm:$0xff]
                %286 = vst [vmem:[%s254 + $0x78] sm:$0xff] %v285
                %v287 = vld [vmem:[%s253 + $0x100] sm:$0xff]
                %288 = vst [vmem:[%s254 + $0x80] sm:$0xff] %v287
                %v289 = vld [vmem:[%s253 + $0x108] sm:$0xff]
                %290 = vst [vmem:[%s254 + $0x88] sm:$0xff] %v289
                %v291 = vld [vmem:[%s253 + $0x120] sm:$0xff]
                %292 = vst [vmem:[%s254 + $0x90] sm:$0xff] %v291
                %v293 = vld [vmem:[%s253 + $0x128] sm:$0xff]
                %294 = vst [vmem:[%s254 + $0x98] sm:$0xff] %v293
                %v295 = vld [vmem:[%s253 + $0x140] sm:$0xff]
                %296 = vst [vmem:[%s254 + $0xa0] sm:$0xff] %v295
                %v297 = vld [vmem:[%s253 + $0x148] sm:$0xff]
                %298 = vst [vmem:[%s254 + $0xa8] sm:$0xff] %v297
                %v299 = vld [vmem:[%s253 + $0x160] sm:$0xff]
                %300 = vst [vmem:[%s254 + $0xb0] sm:$0xff] %v299
                %v301 = vld [vmem:[%s253 + $0x168] sm:$0xff]
                %302 = vst [vmem:[%s254 + $0xb8] sm:$0xff] %v301
                %v303 = vld [vmem:[%s253 + $0x180] sm:$0xff]
                %304 = vst [vmem:[%s254 + $0xc0] sm:$0xff] %v303
                %v305 = vld [vmem:[%s253 + $0x188] sm:$0xff]
                %306 = vst [vmem:[%s254 + $0xc8] sm:$0xff] %v305
                %v307 = vld [vmem:[%s253 + $0x1a0] sm:$0xff]
                %308 = vst [vmem:[%s254 + $0xd0] sm:$0xff] %v307
                %v309 = vld [vmem:[%s253 + $0x1a8] sm:$0xff]
                %310 = vst [vmem:[%s254 + $0xd8] sm:$0xff] %v309
                %v311 = vld [vmem:[%s253 + $0x1c0] sm:$0xff]
                %312 = vst [vmem:[%s254 + $0xe0] sm:$0xff] %v311
                %v313 = vld [vmem:[%s253 + $0x1c8] sm:$0xff]
                %314 = vst [vmem:[%s254 + $0xe8] sm:$0xff] %v313
                %v315 = vld [vmem:[%s253 + $0x1e0] sm:$0xff]
                %316 = vst [vmem:[%s254 + $0xf0] sm:$0xff] %v315
                %v317 = vld [vmem:[%s253 + $0x1e8] sm:$0xff]
                %318 = vst [vmem:[%s254 + $0xf8] sm:$0xff] %v317
                %v319 = vld [vmem:[%s253 + $0x200] sm:$0xff]
                %320 = vst [vmem:[%s254 + $0x100] sm:$0xff] %v319
                %v321 = vld [vmem:[%s253 + $0x208] sm:$0xff]
                %322 = vst [vmem:[%s254 + $0x108] sm:$0xff] %v321
                %v323 = vld [vmem:[%s253 + $0x220] sm:$0xff]
                %324 = vst [vmem:[%s254 + $0x110] sm:$0xff] %v323
                %v325 = vld [vmem:[%s253 + $0x228] sm:$0xff]
                %326 = vst [vmem:[%s254 + $0x118] sm:$0xff] %v325
                %v327 = vld [vmem:[%s253 + $0x240] sm:$0xff]
                %328 = vst [vmem:[%s254 + $0x120] sm:$0xff] %v327
                %v329 = vld [vmem:[%s253 + $0x248] sm:$0xff]
                %330 = vst [vmem:[%s254 + $0x128] sm:$0xff] %v329
                %v331 = vld [vmem:[%s253 + $0x260] sm:$0xff]
                %332 = vst [vmem:[%s254 + $0x130] sm:$0xff] %v331
                %v333 = vld [vmem:[%s253 + $0x268] sm:$0xff]
                %334 = vst [vmem:[%s254 + $0x138] sm:$0xff] %v333
                %v335 = vld [vmem:[%s253 + $0x280] sm:$0xff]
                %336 = vst [vmem:[%s254 + $0x140] sm:$0xff] %v335
                %v337 = vld [vmem:[%s253 + $0x288] sm:$0xff]
                %338 = vst [vmem:[%s254 + $0x148] sm:$0xff] %v337
                %v339 = vld [vmem:[%s253 + $0x2a0] sm:$0xff]
                %340 = vst [vmem:[%s254 + $0x150] sm:$0xff] %v339
                %v341 = vld [vmem:[%s253 + $0x2a8] sm:$0xff]
                %342 = vst [vmem:[%s254 + $0x158] sm:$0xff] %v341
                %v343 = vld [vmem:[%s253 + $0x2c0] sm:$0xff]
                %344 = vst [vmem:[%s254 + $0x160] sm:$0xff] %v343
                %v345 = vld [vmem:[%s253 + $0x2c8] sm:$0xff]
                %346 = vst [vmem:[%s254 + $0x168] sm:$0xff] %v345
                %v347 = vld [vmem:[%s253 + $0x2e0] sm:$0xff]
                %348 = vst [vmem:[%s254 + $0x170] sm:$0xff] %v347
                %v349 = vld [vmem:[%s253 + $0x2e8] sm:$0xff]
                %350 = vst [vmem:[%s254 + $0x178] sm:$0xff] %v349
                %v351 = vld [vmem:[%s253 + $0x300] sm:$0xff]
                %352 = vst [vmem:[%s254 + $0x180] sm:$0xff] %v351
                %v353 = vld [vmem:[%s253 + $0x308] sm:$0xff]
                %354 = vst [vmem:[%s254 + $0x188] sm:$0xff] %v353
              $region53: #{fused_forward.1} parent=47 // loop_footer
                %s252 = sadd.s32 1, %s248
              $region54: #{fused_forward.1} parent=47 // loop_footer_branch
                %247 = sbr.rel target = $region50
              $region55: #{fused_forward.1} parent=47 // loop_exit
                _
            $region48: #{fused_forward.1} parent=43 // pred_fallthru
              _
            // Predicated region
            $region56: #{fused_forward.1} parent=43 // pred_check
              _
            $region57: #{fused_forward.1} parent=43 // pred_check_branch
              %356 = sbr.rel target = $region59
            $region58: #{fused_forward.1} parent=43 // pred_region
              _
            $region59: #{fused_forward.1} parent=43 // pred_fallthru
              _
          $region44: #{fused_forward.1} parent=39 // pred_fallthru
            _
          %357 = vnop
        $region40: #{fused_forward.1} parent=23 // pred_fallthru
          _
      $region24: #{fused_forward.1} parent=5 // pred_fallthru
        _
      %p358 = scmp.le.s32.totalorder 1, %s12
      %p359 = scmp.lt.s32.totalorder %s12, 3
      %p360 = pnand %p358, %p359
      %p361 = pneg %p360
      // Predicated region
      $region60: #{fused_forward.1} parent=5 // pred_check
        _
      $region61: #{fused_forward.1} parent=5 // pred_check_branch
        %363 = sbr.rel (%p360) target = $region63
      $region62: #{fused_forward.1} parent=5 // pred_region
        %s364 = ssub.s32 %s12, 1
        %s365 = sand.u32 %s145, 1
        %s366 = sand.u32 %s145, 1
        %s367 = smul.addr %s366, 400
        %s368 = scalar_lea.vmem [#allocation2], %s367
        // Predicated region
        $region64: #{fused_forward.1} parent=62 // pred_check
          %p369 = pneg %p158
        $region65: #{fused_forward.1} parent=62 // pred_check_branch
          %371 = sbr.rel (%p369) target = $region67
        $region66: #{fused_forward.1} parent=62 // pred_region
          _
        $region67: #{fused_forward.1} parent=62 // pred_fallthru
          _
        %p372 = pneg %p33
        %p373 = pneg %p30
        %p374 = pneg %p54
        %p375 = pneg %p51
        %p376 = scmp.lt.s32.totalorder %s17, 1
        %s377 = scalar_select %p376, %s17, 1
        %s378 = smul.addr %s377, 128
        %s379 = smul.addr %s378, 4
        %s380 = scalar_lea.vmem %s2, %s379
        %p381 = pneg %p80
        %p382 = pneg %p77
        %s383 = smul.u32 2, %s17
        %p384 = scmp.lt.s32.totalorder %s383, 3
        %s385 = scalar_select %p384, %s383, 3
        %s386 = scalar_lea.vmem %s3, %s385
        %p387 = pneg %p106
        %p388 = pneg %p103
        %s389 = smul.u32 2, %s17
        %p390 = scmp.lt.s32.totalorder %s389, 3
        %s391 = scalar_select %p390, %s389, 3
        %s392 = scalar_lea.vmem %s4, %s391
        %p393 = pneg %p132
        %p394 = pneg %p129
        %s395 = sand.u32 %s145, 1
        %s396 = sand.u32 %s145, 1
        %s397 = smul.addr %s396, 400
        %s398 = scalar_lea.vmem [#allocation2], %s397
        %p399 = pneg %p158
        %p400 = pneg %p155
        %p401 = pneg %p184
        %p402 = pneg %p181
        %s403 = sand.u32 %s171, 1
        %s404 = sand.u32 %s171, 1
        %s405 = smul.addr %s404, 400
        %s406 = scalar_lea.vmem [#allocation3], %s405
        %p407 = scmp.lt.s32.totalorder %s17, 1
        %s408 = scalar_select %p407, %s17, 1
        %s409 = smul.addr %s408, 128
        %s410 = smul.addr %s409, 4
        %s411 = scalar_lea.vmem %s2, %s410
        %s412 = smul.u32 2, %s17
        %p413 = scmp.lt.s32.totalorder %s412, 3
        %s414 = scalar_select %p413, %s412, 3
        %s415 = scalar_lea.vmem %s3, %s414
        %s416 = smul.u32 2, %s17
        %s417 = smul.u32 2, %s17
        %p418 = scmp.lt.s32.totalorder %s417, 3
        %s419 = scalar_select %p418, %s417, 3
        %s420 = scalar_lea.vmem %s4, %s419
        %s421 = smul.u32 2, %s17
        %s422 = smul.u32 2, %s17
        %s423 = smul.u32 2, %s17
        %v424 = vld [vmem:[%s1] sm:$0xff]
        %v425 = vld [vmem:[%s1 + $0x8] sm:$0xff]
        %v426 = vld [vmem:[%s1 + $0x10] sm:$0xff]
        %v427 = vld [vmem:[%s1 + $0x18] sm:$0xff]
        %v428 = vld [vmem:[%s1 + $0x20] sm:$0xff]
        %v429 = vld [vmem:[%s1 + $0x28] sm:$0xff]
        %v430 = vld [vmem:[%s1 + $0x30] sm:$0xff]
        %v431 = vld [vmem:[%s1 + $0x38] sm:$0xff]
        %v432 = vld [vmem:[%s1 + $0x40] sm:$0xff]
        %v433 = vld [vmem:[%s1 + $0x48] sm:$0xff]
        %v434 = vld [vmem:[%s1 + $0x50] sm:$0xff]
        %v435 = vld [vmem:[%s1 + $0x58] sm:$0xff]
        %v436 = vld [vmem:[%s1 + $0x60] sm:$0xff]
        %v437 = vld [vmem:[%s1 + $0x68] sm:$0xff]
        %v438 = vld [vmem:[%s1 + $0x70] sm:$0xff]
        %v439 = vld [vmem:[%s1 + $0x78] sm:$0xff]
        %v440 = vld [vmem:[%s1 + $0x80] sm:$0xff]
        %v441 = vld [vmem:[%s1 + $0x88] sm:$0xff]
        %v442 = vld [vmem:[%s1 + $0x90] sm:$0xff]
        %v443 = vld [vmem:[%s1 + $0x98] sm:$0xff]
        %v444 = vld [vmem:[%s1 + $0xa0] sm:$0xff]
        %v445 = vld [vmem:[%s1 + $0xa8] sm:$0xff]
        %v446 = vld [vmem:[%s1 + $0xb0] sm:$0xff]
        %v447 = vld [vmem:[%s1 + $0xb8] sm:$0xff]
        %v448 = vld [vmem:[%s1 + $0xc0] sm:$0xff]
        %v449 = vld [vmem:[%s1 + $0xc8] sm:$0xff]
        %v450 = vld [vmem:[%s1 + $0xd0] sm:$0xff]
        %v451 = vld [vmem:[%s1 + $0xd8] sm:$0xff]
        %v452 = vld [vmem:[%s1 + $0xe0] sm:$0xff]
        %v453 = vld [vmem:[%s1 + $0xe8] sm:$0xff]
        %v454 = vld [vmem:[%s1 + $0xf0] sm:$0xff]
        %v455 = vld [vmem:[%s1 + $0xf8] sm:$0xff]
        %v456 = vld [vmem:[%s1 + $0x100] sm:$0xff]
        %v457 = vld [vmem:[%s1 + $0x108] sm:$0xff]
        %v458 = vld [vmem:[%s1 + $0x110] sm:$0xff]
        %v459 = vld [vmem:[%s1 + $0x118] sm:$0xff]
        %v460 = vld [vmem:[%s1 + $0x120] sm:$0xff]
        %v461 = vld [vmem:[%s1 + $0x128] sm:$0xff]
        %v462 = vld [vmem:[%s1 + $0x130] sm:$0xff]
        %v463 = vld [vmem:[%s1 + $0x138] sm:$0xff]
        %v464 = vld [vmem:[%s1 + $0x140] sm:$0xff]
        %v465 = vld [vmem:[%s1 + $0x148] sm:$0xff]
        %v466 = vld [vmem:[%s1 + $0x150] sm:$0xff]
        %v467 = vld [vmem:[%s1 + $0x158] sm:$0xff]
        %v468 = vld [vmem:[%s1 + $0x160] sm:$0xff]
        %v469 = vld [vmem:[%s1 + $0x168] sm:$0xff]
        %v470 = vld [vmem:[%s1 + $0x170] sm:$0xff]
        %v471 = vld [vmem:[%s1 + $0x178] sm:$0xff]
        %v472 = vld [vmem:[%s1 + $0x180] sm:$0xff]
        %v473 = vld [vmem:[%s1 + $0x188] sm:$0xff]
        %v474 = vld [vmem:[%s1 + $0x190] sm:$0xff]
        %v475 = vld [vmem:[%s1 + $0x198] sm:$0xff]
        %v476 = vld [vmem:[%s1 + $0x1a0] sm:$0xff]
        %v477 = vld [vmem:[%s1 + $0x1a8] sm:$0xff]
        %v478 = vld [vmem:[%s1 + $0x1b0] sm:$0xff]
        %v479 = vld [vmem:[%s1 + $0x1b8] sm:$0xff]
        %v480 = vld [vmem:[%s1 + $0x1c0] sm:$0xff]
        %v481 = vld [vmem:[%s1 + $0x1c8] sm:$0xff]
        %v482 = vld [vmem:[%s1 + $0x1d0] sm:$0xff]
        %v483 = vld [vmem:[%s1 + $0x1d8] sm:$0xff]
        %v484 = vld [vmem:[%s1 + $0x1e0] sm:$0xff]
        %v485 = vld [vmem:[%s1 + $0x1e8] sm:$0xff]
        %v486 = vld [vmem:[%s1 + $0x1f0] sm:$0xff]
        %v487 = vld [vmem:[%s1 + $0x1f8] sm:$0xff]
        %v488 = vld [vmem:[%s1 + $0x200] sm:$0xff]
        %v489 = vld [vmem:[%s1 + $0x208] sm:$0xff]
        %v490 = vld [vmem:[%s1 + $0x210] sm:$0xff]
        %v491 = vld [vmem:[%s1 + $0x218] sm:$0xff]
        %v492 = vld [vmem:[%s1 + $0x220] sm:$0xff]
        %v493 = vld [vmem:[%s1 + $0x228] sm:$0xff]
        %v494 = vld [vmem:[%s1 + $0x230] sm:$0xff]
        %v495 = vld [vmem:[%s1 + $0x238] sm:$0xff]
        %v496 = vld [vmem:[%s1 + $0x240] sm:$0xff]
        %v497 = vld [vmem:[%s1 + $0x248] sm:$0xff]
        %v498 = vld [vmem:[%s1 + $0x250] sm:$0xff]
        %v499 = vld [vmem:[%s1 + $0x258] sm:$0xff]
        %v500 = vld [vmem:[%s1 + $0x260] sm:$0xff]
        %v501 = vld [vmem:[%s1 + $0x268] sm:$0xff]
        %v502 = vld [vmem:[%s1 + $0x270] sm:$0xff]
        %v503 = vld [vmem:[%s1 + $0x278] sm:$0xff]
        %v504 = vld [vmem:[%s1 + $0x280] sm:$0xff]
        %v505 = vld [vmem:[%s1 + $0x288] sm:$0xff]
        %v506 = vld [vmem:[%s1 + $0x290] sm:$0xff]
        %v507 = vld [vmem:[%s1 + $0x298] sm:$0xff]
        %v508 = vld [vmem:[%s1 + $0x2a0] sm:$0xff]
        %v509 = vld [vmem:[%s1 + $0x2a8] sm:$0xff]
        %v510 = vld [vmem:[%s1 + $0x2b0] sm:$0xff]
        %v511 = vld [vmem:[%s1 + $0x2b8] sm:$0xff]
        %v512 = vld [vmem:[%s1 + $0x2c0] sm:$0xff]
        %v513 = vld [vmem:[%s1 + $0x2c8] sm:$0xff]
        %v514 = vld [vmem:[%s1 + $0x2d0] sm:$0xff]
        %v515 = vld [vmem:[%s1 + $0x2d8] sm:$0xff]
        %v516 = vld [vmem:[%s1 + $0x2e0] sm:$0xff]
        %v517 = vld [vmem:[%s1 + $0x2e8] sm:$0xff]
        %v518 = vld [vmem:[%s1 + $0x2f0] sm:$0xff]
        %v519 = vld [vmem:[%s1 + $0x2f8] sm:$0xff]
        %v520 = vld [vmem:[%s1 + $0x300] sm:$0xf]
        %v521 = vld [vmem:[%s1 + $0x308] sm:$0xf]
        %v522 = vld [vmem:[%s1 + $0x310] sm:$0xf]
        %v523 = vld [vmem:[%s1 + $0x318] sm:$0xf]
        %v524 = vld [vmem:[%s0] sm:$0xf]
        %v526 = vperm.slane %v524, 0
        %v527 = vperm.slane %v524, 1
        %v528 = vperm.slane %v524, 2
        %v529 = vperm.slane %v524, 3
        %v534 = vmul.f32 %v424, %v526
        %v535 = vmul.f32 %v425, %v527
        %v536 = vmul.f32 %v426, %v528
        %v537 = vmul.f32 %v427, %v529
        %v538 = vmul.f32 %v428, %v526
        %v539 = vmul.f32 %v429, %v527
        %v540 = vmul.f32 %v430, %v528
        %v541 = vmul.f32 %v431, %v529
        %v542 = vmul.f32 %v432, %v526
        %v543 = vmul.f32 %v433, %v527
        %v544 = vmul.f32 %v434, %v528
        %v545 = vmul.f32 %v435, %v529
        %v546 = vmul.f32 %v436, %v526
        %v547 = vmul.f32 %v437, %v527
        %v548 = vmul.f32 %v438, %v528
        %v549 = vmul.f32 %v439, %v529
        %v550 = vmul.f32 %v440, %v526
        %v551 = vmul.f32 %v441, %v527
        %v552 = vmul.f32 %v442, %v528
        %v553 = vmul.f32 %v443, %v529
        %v554 = vmul.f32 %v444, %v526
        %v555 = vmul.f32 %v445, %v527
        %v556 = vmul.f32 %v446, %v528
        %v557 = vmul.f32 %v447, %v529
        %v558 = vmul.f32 %v448, %v526
        %v559 = vmul.f32 %v449, %v527
        %v560 = vmul.f32 %v450, %v528
        %v561 = vmul.f32 %v451, %v529
        %v562 = vmul.f32 %v452, %v526
        %v563 = vmul.f32 %v453, %v527
        %v564 = vmul.f32 %v454, %v528
        %v565 = vmul.f32 %v455, %v529
        %v566 = vmul.f32 %v456, %v526
        %v567 = vmul.f32 %v457, %v527
        %v568 = vmul.f32 %v458, %v528
        %v569 = vmul.f32 %v459, %v529
        %v570 = vmul.f32 %v460, %v526
        %v571 = vmul.f32 %v461, %v527
        %v572 = vmul.f32 %v462, %v528
        %v573 = vmul.f32 %v463, %v529
        %v574 = vmul.f32 %v464, %v526
        %v575 = vmul.f32 %v465, %v527
        %v576 = vmul.f32 %v466, %v528
        %v577 = vmul.f32 %v467, %v529
        %v578 = vmul.f32 %v468, %v526
        %v579 = vmul.f32 %v469, %v527
        %v580 = vmul.f32 %v470, %v528
        %v581 = vmul.f32 %v471, %v529
        %v582 = vmul.f32 %v472, %v526
        %v583 = vmul.f32 %v473, %v527
        %v584 = vmul.f32 %v474, %v528
        %v585 = vmul.f32 %v475, %v529
        %v586 = vmul.f32 %v476, %v526
        %v587 = vmul.f32 %v477, %v527
        %v588 = vmul.f32 %v478, %v528
        %v589 = vmul.f32 %v479, %v529
        %v590 = vmul.f32 %v480, %v526
        %v591 = vmul.f32 %v481, %v527
        %v592 = vmul.f32 %v482, %v528
        %v593 = vmul.f32 %v483, %v529
        %v594 = vmul.f32 %v484, %v526
        %v595 = vmul.f32 %v485, %v527
        %v596 = vmul.f32 %v486, %v528
        %v597 = vmul.f32 %v487, %v529
        %v598 = vmul.f32 %v488, %v526
        %v599 = vmul.f32 %v489, %v527
        %v600 = vmul.f32 %v490, %v528
        %v601 = vmul.f32 %v491, %v529
        %v602 = vmul.f32 %v492, %v526
        %v603 = vmul.f32 %v493, %v527
        %v604 = vmul.f32 %v494, %v528
        %v605 = vmul.f32 %v495, %v529
        %v606 = vmul.f32 %v496, %v526
        %v607 = vmul.f32 %v497, %v527
        %v608 = vmul.f32 %v498, %v528
        %v609 = vmul.f32 %v499, %v529
        %v610 = vmul.f32 %v500, %v526
        %v611 = vmul.f32 %v501, %v527
        %v612 = vmul.f32 %v502, %v528
        %v613 = vmul.f32 %v503, %v529
        %v614 = vmul.f32 %v504, %v526
        %v615 = vmul.f32 %v505, %v527
        %v616 = vmul.f32 %v506, %v528
        %v617 = vmul.f32 %v507, %v529
        %v618 = vmul.f32 %v508, %v526
        %v619 = vmul.f32 %v509, %v527
        %v620 = vmul.f32 %v510, %v528
        %v621 = vmul.f32 %v511, %v529
        %v622 = vmul.f32 %v512, %v526
        %v623 = vmul.f32 %v513, %v527
        %v624 = vmul.f32 %v514, %v528
        %v625 = vmul.f32 %v515, %v529
        %v626 = vmul.f32 %v516, %v526
        %v627 = vmul.f32 %v517, %v527
        %v628 = vmul.f32 %v518, %v528
        %v629 = vmul.f32 %v519, %v529
        %v630 = vmul.f32 %v520, %v526
        %v631 = vmul.f32 %v521, %v527
        %v632 = vmul.f32 %v522, %v528
        %v633 = vmul.f32 %v523, %v529
        %v634 = vpack.c.bf16 %v538, %v534
        %v635 = vpack.c.bf16 %v539, %v535
        %v636 = vpack.c.bf16 %v540, %v536
        %v637 = vpack.c.bf16 %v541, %v537
        %v638 = vpack.c.bf16 %v546, %v542
        %v639 = vpack.c.bf16 %v547, %v543
        %v640 = vpack.c.bf16 %v548, %v544
        %v641 = vpack.c.bf16 %v549, %v545
        %v642 = vpack.c.bf16 %v554, %v550
        %v643 = vpack.c.bf16 %v555, %v551
        %v644 = vpack.c.bf16 %v556, %v552
        %v645 = vpack.c.bf16 %v557, %v553
        %v646 = vpack.c.bf16 %v562, %v558
        %v647 = vpack.c.bf16 %v563, %v559
        %v648 = vpack.c.bf16 %v564, %v560
        %v649 = vpack.c.bf16 %v565, %v561
        %v650 = vpack.c.bf16 %v570, %v566
        %v651 = vpack.c.bf16 %v571, %v567
        %v652 = vpack.c.bf16 %v572, %v568
        %v653 = vpack.c.bf16 %v573, %v569
        %v654 = vpack.c.bf16 %v578, %v574
        %v655 = vpack.c.bf16 %v579, %v575
        %v656 = vpack.c.bf16 %v580, %v576
        %v657 = vpack.c.bf16 %v581, %v577
        %v658 = vpack.c.bf16 %v586, %v582
        %v659 = vpack.c.bf16 %v587, %v583
        %v660 = vpack.c.bf16 %v588, %v584
        %v661 = vpack.c.bf16 %v589, %v585
        %v662 = vpack.c.bf16 %v594, %v590
        %v663 = vpack.c.bf16 %v595, %v591
        %v664 = vpack.c.bf16 %v596, %v592
        %v665 = vpack.c.bf16 %v597, %v593
        %v666 = vpack.c.bf16 %v602, %v598
        %v667 = vpack.c.bf16 %v603, %v599
        %v668 = vpack.c.bf16 %v604, %v600
        %v669 = vpack.c.bf16 %v605, %v601
        %v670 = vpack.c.bf16 %v610, %v606
        %v671 = vpack.c.bf16 %v611, %v607
        %v672 = vpack.c.bf16 %v612, %v608
        %v673 = vpack.c.bf16 %v613, %v609
        %v674 = vpack.c.bf16 %v618, %v614
        %v675 = vpack.c.bf16 %v619, %v615
        %v676 = vpack.c.bf16 %v620, %v616
        %v677 = vpack.c.bf16 %v621, %v617
        %v678 = vpack.c.bf16 %v626, %v622
        %v679 = vpack.c.bf16 %v627, %v623
        %v680 = vpack.c.bf16 %v628, %v624
        %v681 = vpack.c.bf16 %v629, %v625
        %v682 = vpack.c.bf16 %v630, %v630
        %v683 = vpack.c.bf16 %v631, %v631
        %v684 = vpack.c.bf16 %v632, %v632
        %v685 = vpack.c.bf16 %v633, %v633
        %v686 = vld [vmem:[%s411] sm:$0xff]
        %v687 = vld [vmem:[%s411 + $0x8] sm:$0xff]
        %v688 = vld [vmem:[%s411 + $0x10] sm:$0xff]
        %v689 = vld [vmem:[%s411 + $0x18] sm:$0xff]
        %v690 = vld [vmem:[%s411 + $0x20] sm:$0xff]
        %v691 = vld [vmem:[%s411 + $0x28] sm:$0xff]
        %v692 = vld [vmem:[%s411 + $0x30] sm:$0xff]
        %v693 = vld [vmem:[%s411 + $0x38] sm:$0xff]
        %v694 = vld [vmem:[%s411 + $0x40] sm:$0xff]
        %v695 = vld [vmem:[%s411 + $0x48] sm:$0xff]
        %v696 = vld [vmem:[%s411 + $0x50] sm:$0xff]
        %v697 = vld [vmem:[%s411 + $0x58] sm:$0xff]
        %v698 = vld [vmem:[%s411 + $0x60] sm:$0xff]
        %v699 = vld [vmem:[%s411 + $0x68] sm:$0xff]
        %v700 = vld [vmem:[%s411 + $0x70] sm:$0xff]
        %v701 = vld [vmem:[%s411 + $0x78] sm:$0xff]
        %v702 = vld [vmem:[%s411 + $0x80] sm:$0xff]
        %v703 = vld [vmem:[%s411 + $0x88] sm:$0xff]
        %v704 = vld [vmem:[%s411 + $0x90] sm:$0xff]
        %v705 = vld [vmem:[%s411 + $0x98] sm:$0xff]
        %v706 = vld [vmem:[%s411 + $0xa0] sm:$0xff]
        %v707 = vld [vmem:[%s411 + $0xa8] sm:$0xff]
        %v708 = vld [vmem:[%s411 + $0xb0] sm:$0xff]
        %v709 = vld [vmem:[%s411 + $0xb8] sm:$0xff]
        %v710 = vld [vmem:[%s411 + $0xc0] sm:$0xff]
        %v711 = vld [vmem:[%s411 + $0xc8] sm:$0xff]
        %v712 = vld [vmem:[%s411 + $0xd0] sm:$0xff]
        %v713 = vld [vmem:[%s411 + $0xd8] sm:$0xff]
        %v714 = vld [vmem:[%s411 + $0xe0] sm:$0xff]
        %v715 = vld [vmem:[%s411 + $0xe8] sm:$0xff]
        %v716 = vld [vmem:[%s411 + $0xf0] sm:$0xff]
        %v717 = vld [vmem:[%s411 + $0xf8] sm:$0xff]
        %v718 = vld [vmem:[%s411 + $0x100] sm:$0xff]
        %v719 = vld [vmem:[%s411 + $0x108] sm:$0xff]
        %v720 = vld [vmem:[%s411 + $0x110] sm:$0xff]
        %v721 = vld [vmem:[%s411 + $0x118] sm:$0xff]
        %v722 = vld [vmem:[%s411 + $0x120] sm:$0xff]
        %v723 = vld [vmem:[%s411 + $0x128] sm:$0xff]
        %v724 = vld [vmem:[%s411 + $0x130] sm:$0xff]
        %v725 = vld [vmem:[%s411 + $0x138] sm:$0xff]
        %v726 = vld [vmem:[%s411 + $0x140] sm:$0xff]
        %v727 = vld [vmem:[%s411 + $0x148] sm:$0xff]
        %v728 = vld [vmem:[%s411 + $0x150] sm:$0xff]
        %v729 = vld [vmem:[%s411 + $0x158] sm:$0xff]
        %v730 = vld [vmem:[%s411 + $0x160] sm:$0xff]
        %v731 = vld [vmem:[%s411 + $0x168] sm:$0xff]
        %v732 = vld [vmem:[%s411 + $0x170] sm:$0xff]
        %v733 = vld [vmem:[%s411 + $0x178] sm:$0xff]
        %v734 = vld [vmem:[%s411 + $0x180] sm:$0xff]
        %v735 = vld [vmem:[%s411 + $0x188] sm:$0xff]
        %v736 = vld [vmem:[%s411 + $0x190] sm:$0xff]
        %v737 = vld [vmem:[%s411 + $0x198] sm:$0xff]
        %v738 = vld [vmem:[%s411 + $0x1a0] sm:$0xff]
        %v739 = vld [vmem:[%s411 + $0x1a8] sm:$0xff]
        %v740 = vld [vmem:[%s411 + $0x1b0] sm:$0xff]
        %v741 = vld [vmem:[%s411 + $0x1b8] sm:$0xff]
        %v742 = vld [vmem:[%s411 + $0x1c0] sm:$0xff]
        %v743 = vld [vmem:[%s411 + $0x1c8] sm:$0xff]
        %v744 = vld [vmem:[%s411 + $0x1d0] sm:$0xff]
        %v745 = vld [vmem:[%s411 + $0x1d8] sm:$0xff]
        %v746 = vld [vmem:[%s411 + $0x1e0] sm:$0xff]
        %v747 = vld [vmem:[%s411 + $0x1e8] sm:$0xff]
        %v748 = vld [vmem:[%s411 + $0x1f0] sm:$0xff]
        %v749 = vld [vmem:[%s411 + $0x1f8] sm:$0xff]
        %v814 = vunpack.c.l.b16 %v686
        %v815 = vunpack.c.h.b16 %v686
        %v816 = vunpack.c.l.b16 %v687
        %v817 = vunpack.c.h.b16 %v687
        %v818 = vunpack.c.l.b16 %v688
        %v819 = vunpack.c.h.b16 %v688
        %v820 = vunpack.c.l.b16 %v689
        %v821 = vunpack.c.h.b16 %v689
        %v822 = vunpack.c.l.b16 %v690
        %v823 = vunpack.c.h.b16 %v690
        %v824 = vunpack.c.l.b16 %v691
        %v825 = vunpack.c.h.b16 %v691
        %v826 = vunpack.c.l.b16 %v692
        %v827 = vunpack.c.h.b16 %v692
        %v828 = vunpack.c.l.b16 %v693
        %v829 = vunpack.c.h.b16 %v693
        %v830 = vunpack.c.l.b16 %v694
        %v831 = vunpack.c.h.b16 %v694
        %v832 = vunpack.c.l.b16 %v695
        %v833 = vunpack.c.h.b16 %v695
        %v834 = vunpack.c.l.b16 %v696
        %v835 = vunpack.c.h.b16 %v696
        %v836 = vunpack.c.l.b16 %v697
        %v837 = vunpack.c.h.b16 %v697
        %v838 = vunpack.c.l.b16 %v698
        %v839 = vunpack.c.h.b16 %v698
        %v840 = vunpack.c.l.b16 %v699
        %v841 = vunpack.c.h.b16 %v699
        %v842 = vunpack.c.l.b16 %v700
        %v843 = vunpack.c.h.b16 %v700
        %v844 = vunpack.c.l.b16 %v701
        %v845 = vunpack.c.h.b16 %v701
        %v846 = vunpack.c.l.b16 %v702
        %v847 = vunpack.c.h.b16 %v702
        %v848 = vunpack.c.l.b16 %v703
        %v849 = vunpack.c.h.b16 %v703
        %v850 = vunpack.c.l.b16 %v704
        %v851 = vunpack.c.h.b16 %v704
        %v852 = vunpack.c.l.b16 %v705
        %v853 = vunpack.c.h.b16 %v705
        %v854 = vunpack.c.l.b16 %v706
        %v855 = vunpack.c.h.b16 %v706
        %v856 = vunpack.c.l.b16 %v707
        %v857 = vunpack.c.h.b16 %v707
        %v858 = vunpack.c.l.b16 %v708
        %v859 = vunpack.c.h.b16 %v708
        %v860 = vunpack.c.l.b16 %v709
        %v861 = vunpack.c.h.b16 %v709
        %v862 = vunpack.c.l.b16 %v710
        %v863 = vunpack.c.h.b16 %v710
        %v864 = vunpack.c.l.b16 %v711
        %v865 = vunpack.c.h.b16 %v711
        %v866 = vunpack.c.l.b16 %v712
        %v867 = vunpack.c.h.b16 %v712
        %v868 = vunpack.c.l.b16 %v713
        %v869 = vunpack.c.h.b16 %v713
        %v870 = vunpack.c.l.b16 %v714
        %v871 = vunpack.c.h.b16 %v714
        %v872 = vunpack.c.l.b16 %v715
        %v873 = vunpack.c.h.b16 %v715
        %v874 = vunpack.c.l.b16 %v716
        %v875 = vunpack.c.h.b16 %v716
        %v876 = vunpack.c.l.b16 %v717
        %v877 = vunpack.c.h.b16 %v717
        %v878 = vunpack.c.l.b16 %v718
        %v879 = vunpack.c.h.b16 %v718
        %v880 = vunpack.c.l.b16 %v719
        %v881 = vunpack.c.h.b16 %v719
        %v882 = vunpack.c.l.b16 %v720
        %v883 = vunpack.c.h.b16 %v720
        %v884 = vunpack.c.l.b16 %v721
        %v885 = vunpack.c.h.b16 %v721
        %v886 = vunpack.c.l.b16 %v722
        %v887 = vunpack.c.h.b16 %v722
        %v888 = vunpack.c.l.b16 %v723
        %v889 = vunpack.c.h.b16 %v723
        %v890 = vunpack.c.l.b16 %v724
        %v891 = vunpack.c.h.b16 %v724
        %v892 = vunpack.c.l.b16 %v725
        %v893 = vunpack.c.h.b16 %v725
        %v894 = vunpack.c.l.b16 %v726
        %v895 = vunpack.c.h.b16 %v726
        %v896 = vunpack.c.l.b16 %v727
        %v897 = vunpack.c.h.b16 %v727
        %v898 = vunpack.c.l.b16 %v728
        %v899 = vunpack.c.h.b16 %v728
        %v900 = vunpack.c.l.b16 %v729
        %v901 = vunpack.c.h.b16 %v729
        %v902 = vunpack.c.l.b16 %v730
        %v903 = vunpack.c.h.b16 %v730
        %v904 = vunpack.c.l.b16 %v731
        %v905 = vunpack.c.h.b16 %v731
        %v906 = vunpack.c.l.b16 %v732
        %v907 = vunpack.c.h.b16 %v732
        %v908 = vunpack.c.l.b16 %v733
        %v909 = vunpack.c.h.b16 %v733
        %v910 = vunpack.c.l.b16 %v734
        %v911 = vunpack.c.h.b16 %v734
        %v912 = vunpack.c.l.b16 %v735
        %v913 = vunpack.c.h.b16 %v735
        %v914 = vunpack.c.l.b16 %v736
        %v915 = vunpack.c.h.b16 %v736
        %v916 = vunpack.c.l.b16 %v737
        %v917 = vunpack.c.h.b16 %v737
        %v918 = vunpack.c.l.b16 %v738
        %v919 = vunpack.c.h.b16 %v738
        %v920 = vunpack.c.l.b16 %v739
        %v921 = vunpack.c.h.b16 %v739
        %v922 = vunpack.c.l.b16 %v740
        %v923 = vunpack.c.h.b16 %v740
        %v924 = vunpack.c.l.b16 %v741
        %v925 = vunpack.c.h.b16 %v741
        %v926 = vunpack.c.l.b16 %v742
        %v927 = vunpack.c.h.b16 %v742
        %v928 = vunpack.c.l.b16 %v743
        %v929 = vunpack.c.h.b16 %v743
        %v930 = vunpack.c.l.b16 %v744
        %v931 = vunpack.c.h.b16 %v744
        %v932 = vunpack.c.l.b16 %v745
        %v933 = vunpack.c.h.b16 %v745
        %v934 = vunpack.c.l.b16 %v746
        %v935 = vunpack.c.h.b16 %v746
        %v936 = vunpack.c.l.b16 %v747
        %v937 = vunpack.c.h.b16 %v747
        %v938 = vunpack.c.l.b16 %v748
        %v939 = vunpack.c.h.b16 %v748
        %v940 = vunpack.c.l.b16 %v749
        %v941 = vunpack.c.h.b16 %v749
        %v942 = vpack.c.b16 %v816, %v814
        %v943 = vpack.c.b16 %v817, %v815
        %v944 = vpack.c.b16 %v820, %v818
        %v945 = vpack.c.b16 %v821, %v819
        %v946 = vpack.c.b16 %v824, %v822
        %v947 = vpack.c.b16 %v825, %v823
        %v948 = vpack.c.b16 %v828, %v826
        %v949 = vpack.c.b16 %v829, %v827
        %v950 = vpack.c.b16 %v832, %v830
        %v951 = vpack.c.b16 %v833, %v831
        %v952 = vpack.c.b16 %v836, %v834
        %v953 = vpack.c.b16 %v837, %v835
        %v954 = vpack.c.b16 %v840, %v838
        %v955 = vpack.c.b16 %v841, %v839
        %v956 = vpack.c.b16 %v844, %v842
        %v957 = vpack.c.b16 %v845, %v843
        %v958 = vpack.c.b16 %v848, %v846
        %v959 = vpack.c.b16 %v849, %v847
        %v960 = vpack.c.b16 %v852, %v850
        %v961 = vpack.c.b16 %v853, %v851
        %v962 = vpack.c.b16 %v856, %v854
        %v963 = vpack.c.b16 %v857, %v855
        %v964 = vpack.c.b16 %v860, %v858
        %v965 = vpack.c.b16 %v861, %v859
        %v966 = vpack.c.b16 %v864, %v862
        %v967 = vpack.c.b16 %v865, %v863
        %v968 = vpack.c.b16 %v868, %v866
        %v969 = vpack.c.b16 %v869, %v867
        %v970 = vpack.c.b16 %v872, %v870
        %v971 = vpack.c.b16 %v873, %v871
        %v972 = vpack.c.b16 %v876, %v874
        %v973 = vpack.c.b16 %v877, %v875
        %v974 = vpack.c.b16 %v880, %v878
        %v975 = vpack.c.b16 %v881, %v879
        %v976 = vpack.c.b16 %v884, %v882
        %v977 = vpack.c.b16 %v885, %v883
        %v978 = vpack.c.b16 %v888, %v886
        %v979 = vpack.c.b16 %v889, %v887
        %v980 = vpack.c.b16 %v892, %v890
        %v981 = vpack.c.b16 %v893, %v891
        %v982 = vpack.c.b16 %v896, %v894
        %v983 = vpack.c.b16 %v897, %v895
        %v984 = vpack.c.b16 %v900, %v898
        %v985 = vpack.c.b16 %v901, %v899
        %v986 = vpack.c.b16 %v904, %v902
        %v987 = vpack.c.b16 %v905, %v903
        %v988 = vpack.c.b16 %v908, %v906
        %v989 = vpack.c.b16 %v909, %v907
        %v990 = vpack.c.b16 %v912, %v910
        %v991 = vpack.c.b16 %v913, %v911
        %v992 = vpack.c.b16 %v916, %v914
        %v993 = vpack.c.b16 %v917, %v915
        %v994 = vpack.c.b16 %v920, %v918
        %v995 = vpack.c.b16 %v921, %v919
        %v996 = vpack.c.b16 %v924, %v922
        %v997 = vpack.c.b16 %v925, %v923
        %v998 = vpack.c.b16 %v928, %v926
        %v999 = vpack.c.b16 %v929, %v927
        %v1000 = vpack.c.b16 %v932, %v930
        %v1001 = vpack.c.b16 %v933, %v931
        %v1002 = vpack.c.b16 %v936, %v934
        %v1003 = vpack.c.b16 %v937, %v935
        %v1004 = vpack.c.b16 %v940, %v938
        %v1005 = vpack.c.b16 %v941, %v939
        %1070 = vmatpush.bf16.msra.mxu0 %v956
        %1071 = vmatpush.bf16.msra.mxu0 %v954
        %1072 = vmatpush.bf16.msra.mxu0 %v952
        %1073 = vmatpush.bf16.msra.mxu0 %v950
        %1074 = vmatpush.bf16.msra.mxu0 %v948
        %1075 = vmatpush.bf16.msra.mxu0 %v946
        %1076 = vmatpush.bf16.msra.mxu0 %v944
        %1077 = vmatpush.bf16.msra.mxu0 %v942
        %1078 = vmatmul.bf16.gmra.mxu0 %v634
        %v1079 = vpop.f32.mrf.mxu0
        %v1080 = vadd.f32 0.0, %v1079
        %v1081 = vpop.f32.mrf.mxu0
        %v1082 = vadd.f32 0.0, %v1081
        %1083 = vmatmul.bf16.gmra.mxu0 %v638
        %v1084 = vpop.f32.mrf.mxu0
        %v1085 = vadd.f32 0.0, %v1084
        %v1086 = vpop.f32.mrf.mxu0
        %v1087 = vadd.f32 0.0, %v1086
        %1088 = vmatmul.bf16.gmra.mxu0 %v642
        %v1089 = vpop.f32.mrf.mxu0
        %v1090 = vadd.f32 0.0, %v1089
        %v1091 = vpop.f32.mrf.mxu0
        %v1092 = vadd.f32 0.0, %v1091
        %1093 = vmatmul.bf16.gmra.mxu0 %v646
        %v1094 = vpop.f32.mrf.mxu0
        %v1095 = vadd.f32 0.0, %v1094
        %v1096 = vpop.f32.mrf.mxu0
        %v1097 = vadd.f32 0.0, %v1096
        %1098 = vmatmul.bf16.gmra.mxu0 %v650
        %v1099 = vpop.f32.mrf.mxu0
        %v1100 = vadd.f32 0.0, %v1099
        %v1101 = vpop.f32.mrf.mxu0
        %v1102 = vadd.f32 0.0, %v1101
        %1103 = vmatmul.bf16.gmra.mxu0 %v654
        %v1104 = vpop.f32.mrf.mxu0
        %v1105 = vadd.f32 0.0, %v1104
        %v1106 = vpop.f32.mrf.mxu0
        %v1107 = vadd.f32 0.0, %v1106
        %1108 = vmatmul.bf16.gmra.mxu0 %v658
        %v1109 = vpop.f32.mrf.mxu0
        %v1110 = vadd.f32 0.0, %v1109
        %v1111 = vpop.f32.mrf.mxu0
        %v1112 = vadd.f32 0.0, %v1111
        %1113 = vmatmul.bf16.gmra.mxu0 %v662
        %v1114 = vpop.f32.mrf.mxu0
        %v1115 = vadd.f32 0.0, %v1114
        %v1116 = vpop.f32.mrf.mxu0
        %v1117 = vadd.f32 0.0, %v1116
        %1118 = vmatmul.bf16.gmra.mxu0 %v666
        %v1119 = vpop.f32.mrf.mxu0
        %v1120 = vadd.f32 0.0, %v1119
        %v1121 = vpop.f32.mrf.mxu0
        %v1122 = vadd.f32 0.0, %v1121
        %1123 = vmatmul.bf16.gmra.mxu0 %v670
        %v1124 = vpop.f32.mrf.mxu0
        %v1125 = vadd.f32 0.0, %v1124
        %v1126 = vpop.f32.mrf.mxu0
        %v1127 = vadd.f32 0.0, %v1126
        %1128 = vmatmul.bf16.gmra.mxu0 %v674
        %v1129 = vpop.f32.mrf.mxu0
        %v1130 = vadd.f32 0.0, %v1129
        %v1131 = vpop.f32.mrf.mxu0
        %v1132 = vadd.f32 0.0, %v1131
        %1133 = vmatmul.bf16.gmra.mxu0 %v678
        %v1134 = vpop.f32.mrf.mxu0
        %v1135 = vadd.f32 0.0, %v1134
        %v1136 = vpop.f32.mrf.mxu0
        %v1137 = vadd.f32 0.0, %v1136
        %1138 = vmatmul.bf16.gmra.mxu0 %v682
        %v1139 = vpop.f32.mrf.mxu0
        %v1140 = vadd.f32 0.0, %v1139
        %v1141 = vpop.f32.mrf.mxu0
        %1142 = vdwg.mxu0
        %1143 = vmatpush.bf16.msra.mxu0 %v972
        %1144 = vmatpush.bf16.msra.mxu0 %v970
        %1145 = vmatpush.bf16.msra.mxu0 %v968
        %1146 = vmatpush.bf16.msra.mxu0 %v966
        %1147 = vmatpush.bf16.msra.mxu0 %v964
        %1148 = vmatpush.bf16.msra.mxu0 %v962
        %1149 = vmatpush.bf16.msra.mxu0 %v960
        %1150 = vmatpush.bf16.msra.mxu0 %v958
        %1151 = vmatmul.bf16.gmra.mxu0 %v635
        %v1152 = vpop.f32.mrf.mxu0
        %v1153 = vadd.f32 %v1080, %v1152
        %v1154 = vpop.f32.mrf.mxu0
        %v1155 = vadd.f32 %v1082, %v1154
        %1156 = vmatmul.bf16.gmra.mxu0 %v639
        %v1157 = vpop.f32.mrf.mxu0
        %v1158 = vadd.f32 %v1085, %v1157
        %v1159 = vpop.f32.mrf.mxu0
        %v1160 = vadd.f32 %v1087, %v1159
        %1161 = vmatmul.bf16.gmra.mxu0 %v643
        %v1162 = vpop.f32.mrf.mxu0
        %v1163 = vadd.f32 %v1090, %v1162
        %v1164 = vpop.f32.mrf.mxu0
        %v1165 = vadd.f32 %v1092, %v1164
        %1166 = vmatmul.bf16.gmra.mxu0 %v647
        %v1167 = vpop.f32.mrf.mxu0
        %v1168 = vadd.f32 %v1095, %v1167
        %v1169 = vpop.f32.mrf.mxu0
        %v1170 = vadd.f32 %v1097, %v1169
        %1171 = vmatmul.bf16.gmra.mxu0 %v651
        %v1172 = vpop.f32.mrf.mxu0
        %v1173 = vadd.f32 %v1100, %v1172
        %v1174 = vpop.f32.mrf.mxu0
        %v1175 = vadd.f32 %v1102, %v1174
        %1176 = vmatmul.bf16.gmra.mxu0 %v655
        %v1177 = vpop.f32.mrf.mxu0
        %v1178 = vadd.f32 %v1105, %v1177
        %v1179 = vpop.f32.mrf.mxu0
        %v1180 = vadd.f32 %v1107, %v1179
        %1181 = vmatmul.bf16.gmra.mxu0 %v659
        %v1182 = vpop.f32.mrf.mxu0
        %v1183 = vadd.f32 %v1110, %v1182
        %v1184 = vpop.f32.mrf.mxu0
        %v1185 = vadd.f32 %v1112, %v1184
        %1186 = vmatmul.bf16.gmra.mxu0 %v663
        %v1187 = vpop.f32.mrf.mxu0
        %v1188 = vadd.f32 %v1115, %v1187
        %v1189 = vpop.f32.mrf.mxu0
        %v1190 = vadd.f32 %v1117, %v1189
        %1191 = vmatmul.bf16.gmra.mxu0 %v667
        %v1192 = vpop.f32.mrf.mxu0
        %v1193 = vadd.f32 %v1120, %v1192
        %v1194 = vpop.f32.mrf.mxu0
        %v1195 = vadd.f32 %v1122, %v1194
        %1196 = vmatmul.bf16.gmra.mxu0 %v671
        %v1197 = vpop.f32.mrf.mxu0
        %v1198 = vadd.f32 %v1125, %v1197
        %v1199 = vpop.f32.mrf.mxu0
        %v1200 = vadd.f32 %v1127, %v1199
        %1201 = vmatmul.bf16.gmra.mxu0 %v675
        %v1202 = vpop.f32.mrf.mxu0
        %v1203 = vadd.f32 %v1130, %v1202
        %v1204 = vpop.f32.mrf.mxu0
        %v1205 = vadd.f32 %v1132, %v1204
        %1206 = vmatmul.bf16.gmra.mxu0 %v679
        %v1207 = vpop.f32.mrf.mxu0
        %v1208 = vadd.f32 %v1135, %v1207
        %v1209 = vpop.f32.mrf.mxu0
        %v1210 = vadd.f32 %v1137, %v1209
        %1211 = vmatmul.bf16.gmra.mxu0 %v683
        %v1212 = vpop.f32.mrf.mxu0
        %v1213 = vadd.f32 %v1140, %v1212
        %v1214 = vpop.f32.mrf.mxu0
        %1215 = vdwg.mxu0
        %1216 = vmatpush.bf16.msra.mxu0 %v988
        %1217 = vmatpush.bf16.msra.mxu0 %v986
        %1218 = vmatpush.bf16.msra.mxu0 %v984
        %1219 = vmatpush.bf16.msra.mxu0 %v982
        %1220 = vmatpush.bf16.msra.mxu0 %v980
        %1221 = vmatpush.bf16.msra.mxu0 %v978
        %1222 = vmatpush.bf16.msra.mxu0 %v976
        %1223 = vmatpush.bf16.msra.mxu0 %v974
        %1224 = vmatmul.bf16.gmra.mxu0 %v636
        %v1225 = vpop.f32.mrf.mxu0
        %v1226 = vadd.f32 %v1153, %v1225
        %v1227 = vpop.f32.mrf.mxu0
        %v1228 = vadd.f32 %v1155, %v1227
        %1229 = vmatmul.bf16.gmra.mxu0 %v640
        %v1230 = vpop.f32.mrf.mxu0
        %v1231 = vadd.f32 %v1158, %v1230
        %v1232 = vpop.f32.mrf.mxu0
        %v1233 = vadd.f32 %v1160, %v1232
        %1234 = vmatmul.bf16.gmra.mxu0 %v644
        %v1235 = vpop.f32.mrf.mxu0
        %v1236 = vadd.f32 %v1163, %v1235
        %v1237 = vpop.f32.mrf.mxu0
        %v1238 = vadd.f32 %v1165, %v1237
        %1239 = vmatmul.bf16.gmra.mxu0 %v648
        %v1240 = vpop.f32.mrf.mxu0
        %v1241 = vadd.f32 %v1168, %v1240
        %v1242 = vpop.f32.mrf.mxu0
        %v1243 = vadd.f32 %v1170, %v1242
        %1244 = vmatmul.bf16.gmra.mxu0 %v652
        %v1245 = vpop.f32.mrf.mxu0
        %v1246 = vadd.f32 %v1173, %v1245
        %v1247 = vpop.f32.mrf.mxu0
        %v1248 = vadd.f32 %v1175, %v1247
        %1249 = vmatmul.bf16.gmra.mxu0 %v656
        %v1250 = vpop.f32.mrf.mxu0
        %v1251 = vadd.f32 %v1178, %v1250
        %v1252 = vpop.f32.mrf.mxu0
        %v1253 = vadd.f32 %v1180, %v1252
        %1254 = vmatmul.bf16.gmra.mxu0 %v660
        %v1255 = vpop.f32.mrf.mxu0
        %v1256 = vadd.f32 %v1183, %v1255
        %v1257 = vpop.f32.mrf.mxu0
        %v1258 = vadd.f32 %v1185, %v1257
        %1259 = vmatmul.bf16.gmra.mxu0 %v664
        %v1260 = vpop.f32.mrf.mxu0
        %v1261 = vadd.f32 %v1188, %v1260
        %v1262 = vpop.f32.mrf.mxu0
        %v1263 = vadd.f32 %v1190, %v1262
        %1264 = vmatmul.bf16.gmra.mxu0 %v668
        %v1265 = vpop.f32.mrf.mxu0
        %v1266 = vadd.f32 %v1193, %v1265
        %v1267 = vpop.f32.mrf.mxu0
        %v1268 = vadd.f32 %v1195, %v1267
        %1269 = vmatmul.bf16.gmra.mxu0 %v672
        %v1270 = vpop.f32.mrf.mxu0
        %v1271 = vadd.f32 %v1198, %v1270
        %v1272 = vpop.f32.mrf.mxu0
        %v1273 = vadd.f32 %v1200, %v1272
        %1274 = vmatmul.bf16.gmra.mxu0 %v676
        %v1275 = vpop.f32.mrf.mxu0
        %v1276 = vadd.f32 %v1203, %v1275
        %v1277 = vpop.f32.mrf.mxu0
        %v1278 = vadd.f32 %v1205, %v1277
        %1279 = vmatmul.bf16.gmra.mxu0 %v680
        %v1280 = vpop.f32.mrf.mxu0
        %v1281 = vadd.f32 %v1208, %v1280
        %v1282 = vpop.f32.mrf.mxu0
        %v1283 = vadd.f32 %v1210, %v1282
        %1284 = vmatmul.bf16.gmra.mxu0 %v684
        %v1285 = vpop.f32.mrf.mxu0
        %v1286 = vadd.f32 %v1213, %v1285
        %v1287 = vpop.f32.mrf.mxu0
        %1288 = vdwg.mxu0
        %1289 = vmatpush.bf16.msra.mxu0 %v1004
        %1290 = vmatpush.bf16.msra.mxu0 %v1002
        %1291 = vmatpush.bf16.msra.mxu0 %v1000
        %1292 = vmatpush.bf16.msra.mxu0 %v998
        %1293 = vmatpush.bf16.msra.mxu0 %v996
        %1294 = vmatpush.bf16.msra.mxu0 %v994
        %1295 = vmatpush.bf16.msra.mxu0 %v992
        %1296 = vmatpush.bf16.msra.mxu0 %v990
        %1297 = vmatmul.bf16.gmra.mxu0 %v637
        %v1298 = vpop.f32.mrf.mxu0
        %v1299 = vadd.f32 %v1226, %v1298
        %v1300 = vpop.f32.mrf.mxu0
        %v1301 = vadd.f32 %v1228, %v1300
        %1302 = vmatmul.bf16.gmra.mxu0 %v641
        %v1303 = vpop.f32.mrf.mxu0
        %v1304 = vadd.f32 %v1231, %v1303
        %v1305 = vpop.f32.mrf.mxu0
        %v1306 = vadd.f32 %v1233, %v1305
        %1307 = vmatmul.bf16.gmra.mxu0 %v645
        %v1308 = vpop.f32.mrf.mxu0
        %v1309 = vadd.f32 %v1236, %v1308
        %v1310 = vpop.f32.mrf.mxu0
        %v1311 = vadd.f32 %v1238, %v1310
        %1312 = vmatmul.bf16.gmra.mxu0 %v649
        %v1313 = vpop.f32.mrf.mxu0
        %v1314 = vadd.f32 %v1241, %v1313
        %v1315 = vpop.f32.mrf.mxu0
        %v1316 = vadd.f32 %v1243, %v1315
        %1317 = vmatmul.bf16.gmra.mxu0 %v653
        %v1318 = vpop.f32.mrf.mxu0
        %v1319 = vadd.f32 %v1246, %v1318
        %v1320 = vpop.f32.mrf.mxu0
        %v1321 = vadd.f32 %v1248, %v1320
        %1322 = vmatmul.bf16.gmra.mxu0 %v657
        %v1323 = vpop.f32.mrf.mxu0
        %v1324 = vadd.f32 %v1251, %v1323
        %v1325 = vpop.f32.mrf.mxu0
        %v1326 = vadd.f32 %v1253, %v1325
        %1327 = vmatmul.bf16.gmra.mxu0 %v661
        %v1328 = vpop.f32.mrf.mxu0
        %v1329 = vadd.f32 %v1256, %v1328
        %v1330 = vpop.f32.mrf.mxu0
        %v1331 = vadd.f32 %v1258, %v1330
        %1332 = vmatmul.bf16.gmra.mxu0 %v665
        %v1333 = vpop.f32.mrf.mxu0
        %v1334 = vadd.f32 %v1261, %v1333
        %v1335 = vpop.f32.mrf.mxu0
        %v1336 = vadd.f32 %v1263, %v1335
        %1337 = vmatmul.bf16.gmra.mxu0 %v669
        %v1338 = vpop.f32.mrf.mxu0
        %v1339 = vadd.f32 %v1266, %v1338
        %v1340 = vpop.f32.mrf.mxu0
        %v1341 = vadd.f32 %v1268, %v1340
        %1342 = vmatmul.bf16.gmra.mxu0 %v673
        %v1343 = vpop.f32.mrf.mxu0
        %v1344 = vadd.f32 %v1271, %v1343
        %v1345 = vpop.f32.mrf.mxu0
        %v1346 = vadd.f32 %v1273, %v1345
        %1347 = vmatmul.bf16.gmra.mxu0 %v677
        %v1348 = vpop.f32.mrf.mxu0
        %v1349 = vadd.f32 %v1276, %v1348
        %v1350 = vpop.f32.mrf.mxu0
        %v1351 = vadd.f32 %v1278, %v1350
        %1352 = vmatmul.bf16.gmra.mxu0 %v681
        %v1353 = vpop.f32.mrf.mxu0
        %v1354 = vadd.f32 %v1281, %v1353
        %v1355 = vpop.f32.mrf.mxu0
        %v1356 = vadd.f32 %v1283, %v1355
        %1357 = vmatmul.bf16.gmra.mxu0 %v685
        %v1358 = vpop.f32.mrf.mxu0
        %v1359 = vadd.f32 %v1286, %v1358
        %v1360 = vpop.f32.mrf.mxu0
        %1361 = vdwg.mxu0
        %1362 = vmatpush.bf16.msra.mxu0 %v957
        %1363 = vmatpush.bf16.msra.mxu0 %v955
        %1364 = vmatpush.bf16.msra.mxu0 %v953
        %1365 = vmatpush.bf16.msra.mxu0 %v951
        %1366 = vmatpush.bf16.msra.mxu0 %v949
        %1367 = vmatpush.bf16.msra.mxu0 %v947
        %1368 = vmatpush.bf16.msra.mxu0 %v945
        %1369 = vmatpush.bf16.msra.mxu0 %v943
        %1370 = vmatmul.bf16.gmra.mxu0 %v634
        %v1371 = vpop.f32.mrf.mxu0
        %v1372 = vadd.f32 0.0, %v1371
        %v1373 = vpop.f32.mrf.mxu0
        %v1374 = vadd.f32 0.0, %v1373
        %1375 = vmatmul.bf16.gmra.mxu0 %v638
        %v1376 = vpop.f32.mrf.mxu0
        %v1377 = vadd.f32 0.0, %v1376
        %v1378 = vpop.f32.mrf.mxu0
        %v1379 = vadd.f32 0.0, %v1378
        %1380 = vmatmul.bf16.gmra.mxu0 %v642
        %v1381 = vpop.f32.mrf.mxu0
        %v1382 = vadd.f32 0.0, %v1381
        %v1383 = vpop.f32.mrf.mxu0
        %v1384 = vadd.f32 0.0, %v1383
        %1385 = vmatmul.bf16.gmra.mxu0 %v646
        %v1386 = vpop.f32.mrf.mxu0
        %v1387 = vadd.f32 0.0, %v1386
        %v1388 = vpop.f32.mrf.mxu0
        %v1389 = vadd.f32 0.0, %v1388
        %1390 = vmatmul.bf16.gmra.mxu0 %v650
        %v1391 = vpop.f32.mrf.mxu0
        %v1392 = vadd.f32 0.0, %v1391
        %v1393 = vpop.f32.mrf.mxu0
        %v1394 = vadd.f32 0.0, %v1393
        %1395 = vmatmul.bf16.gmra.mxu0 %v654
        %v1396 = vpop.f32.mrf.mxu0
        %v1397 = vadd.f32 0.0, %v1396
        %v1398 = vpop.f32.mrf.mxu0
        %v1399 = vadd.f32 0.0, %v1398
        %1400 = vmatmul.bf16.gmra.mxu0 %v658
        %v1401 = vpop.f32.mrf.mxu0
        %v1402 = vadd.f32 0.0, %v1401
        %v1403 = vpop.f32.mrf.mxu0
        %v1404 = vadd.f32 0.0, %v1403
        %1405 = vmatmul.bf16.gmra.mxu0 %v662
        %v1406 = vpop.f32.mrf.mxu0
        %v1407 = vadd.f32 0.0, %v1406
        %v1408 = vpop.f32.mrf.mxu0
        %v1409 = vadd.f32 0.0, %v1408
        %1410 = vmatmul.bf16.gmra.mxu0 %v666
        %v1411 = vpop.f32.mrf.mxu0
        %v1412 = vadd.f32 0.0, %v1411
        %v1413 = vpop.f32.mrf.mxu0
        %v1414 = vadd.f32 0.0, %v1413
        %1415 = vmatmul.bf16.gmra.mxu0 %v670
        %v1416 = vpop.f32.mrf.mxu0
        %v1417 = vadd.f32 0.0, %v1416
        %v1418 = vpop.f32.mrf.mxu0
        %v1419 = vadd.f32 0.0, %v1418
        %1420 = vmatmul.bf16.gmra.mxu0 %v674
        %v1421 = vpop.f32.mrf.mxu0
        %v1422 = vadd.f32 0.0, %v1421
        %v1423 = vpop.f32.mrf.mxu0
        %v1424 = vadd.f32 0.0, %v1423
        %1425 = vmatmul.bf16.gmra.mxu0 %v678
        %v1426 = vpop.f32.mrf.mxu0
        %v1427 = vadd.f32 0.0, %v1426
        %v1428 = vpop.f32.mrf.mxu0
        %v1429 = vadd.f32 0.0, %v1428
        %1430 = vmatmul.bf16.gmra.mxu0 %v682
        %v1431 = vpop.f32.mrf.mxu0
        %v1432 = vadd.f32 0.0, %v1431
        %v1433 = vpop.f32.mrf.mxu0
        %1434 = vdwg.mxu0
        %1435 = vmatpush.bf16.msra.mxu0 %v973
        %1436 = vmatpush.bf16.msra.mxu0 %v971
        %1437 = vmatpush.bf16.msra.mxu0 %v969
        %1438 = vmatpush.bf16.msra.mxu0 %v967
        %1439 = vmatpush.bf16.msra.mxu0 %v965
        %1440 = vmatpush.bf16.msra.mxu0 %v963
        %1441 = vmatpush.bf16.msra.mxu0 %v961
        %1442 = vmatpush.bf16.msra.mxu0 %v959
        %1443 = vmatmul.bf16.gmra.mxu0 %v635
        %v1444 = vpop.f32.mrf.mxu0
        %v1445 = vadd.f32 %v1372, %v1444
        %v1446 = vpop.f32.mrf.mxu0
        %v1447 = vadd.f32 %v1374, %v1446
        %1448 = vmatmul.bf16.gmra.mxu0 %v639
        %v1449 = vpop.f32.mrf.mxu0
        %v1450 = vadd.f32 %v1377, %v1449
        %v1451 = vpop.f32.mrf.mxu0
        %v1452 = vadd.f32 %v1379, %v1451
        %1453 = vmatmul.bf16.gmra.mxu0 %v643
        %v1454 = vpop.f32.mrf.mxu0
        %v1455 = vadd.f32 %v1382, %v1454
        %v1456 = vpop.f32.mrf.mxu0
        %v1457 = vadd.f32 %v1384, %v1456
        %1458 = vmatmul.bf16.gmra.mxu0 %v647
        %v1459 = vpop.f32.mrf.mxu0
        %v1460 = vadd.f32 %v1387, %v1459
        %v1461 = vpop.f32.mrf.mxu0
        %v1462 = vadd.f32 %v1389, %v1461
        %1463 = vmatmul.bf16.gmra.mxu0 %v651
        %v1464 = vpop.f32.mrf.mxu0
        %v1465 = vadd.f32 %v1392, %v1464
        %v1466 = vpop.f32.mrf.mxu0
        %v1467 = vadd.f32 %v1394, %v1466
        %1468 = vmatmul.bf16.gmra.mxu0 %v655
        %v1469 = vpop.f32.mrf.mxu0
        %v1470 = vadd.f32 %v1397, %v1469
        %v1471 = vpop.f32.mrf.mxu0
        %v1472 = vadd.f32 %v1399, %v1471
        %1473 = vmatmul.bf16.gmra.mxu0 %v659
        %v1474 = vpop.f32.mrf.mxu0
        %v1475 = vadd.f32 %v1402, %v1474
        %v1476 = vpop.f32.mrf.mxu0
        %v1477 = vadd.f32 %v1404, %v1476
        %1478 = vmatmul.bf16.gmra.mxu0 %v663
        %v1479 = vpop.f32.mrf.mxu0
        %v1480 = vadd.f32 %v1407, %v1479
        %v1481 = vpop.f32.mrf.mxu0
        %v1482 = vadd.f32 %v1409, %v1481
        %1483 = vmatmul.bf16.gmra.mxu0 %v667
        %v1484 = vpop.f32.mrf.mxu0
        %v1485 = vadd.f32 %v1412, %v1484
        %v1486 = vpop.f32.mrf.mxu0
        %v1487 = vadd.f32 %v1414, %v1486
        %1488 = vmatmul.bf16.gmra.mxu0 %v671
        %v1489 = vpop.f32.mrf.mxu0
        %v1490 = vadd.f32 %v1417, %v1489
        %v1491 = vpop.f32.mrf.mxu0
        %v1492 = vadd.f32 %v1419, %v1491
        %1493 = vmatmul.bf16.gmra.mxu0 %v675
        %v1494 = vpop.f32.mrf.mxu0
        %v1495 = vadd.f32 %v1422, %v1494
        %v1496 = vpop.f32.mrf.mxu0
        %v1497 = vadd.f32 %v1424, %v1496
        %1498 = vmatmul.bf16.gmra.mxu0 %v679
        %v1499 = vpop.f32.mrf.mxu0
        %v1500 = vadd.f32 %v1427, %v1499
        %v1501 = vpop.f32.mrf.mxu0
        %v1502 = vadd.f32 %v1429, %v1501
        %1503 = vmatmul.bf16.gmra.mxu0 %v683
        %v1504 = vpop.f32.mrf.mxu0
        %v1505 = vadd.f32 %v1432, %v1504
        %v1506 = vpop.f32.mrf.mxu0
        %1507 = vdwg.mxu0
        %1508 = vmatpush.bf16.msra.mxu0 %v989
        %1509 = vmatpush.bf16.msra.mxu0 %v987
        %1510 = vmatpush.bf16.msra.mxu0 %v985
        %1511 = vmatpush.bf16.msra.mxu0 %v983
        %1512 = vmatpush.bf16.msra.mxu0 %v981
        %1513 = vmatpush.bf16.msra.mxu0 %v979
        %1514 = vmatpush.bf16.msra.mxu0 %v977
        %1515 = vmatpush.bf16.msra.mxu0 %v975
        %1516 = vmatmul.bf16.gmra.mxu0 %v636
        %v1517 = vpop.f32.mrf.mxu0
        %v1518 = vadd.f32 %v1445, %v1517
        %v1519 = vpop.f32.mrf.mxu0
        %v1520 = vadd.f32 %v1447, %v1519
        %1521 = vmatmul.bf16.gmra.mxu0 %v640
        %v1522 = vpop.f32.mrf.mxu0
        %v1523 = vadd.f32 %v1450, %v1522
        %v1524 = vpop.f32.mrf.mxu0
        %v1525 = vadd.f32 %v1452, %v1524
        %1526 = vmatmul.bf16.gmra.mxu0 %v644
        %v1527 = vpop.f32.mrf.mxu0
        %v1528 = vadd.f32 %v1455, %v1527
        %v1529 = vpop.f32.mrf.mxu0
        %v1530 = vadd.f32 %v1457, %v1529
        %1531 = vmatmul.bf16.gmra.mxu0 %v648
        %v1532 = vpop.f32.mrf.mxu0
        %v1533 = vadd.f32 %v1460, %v1532
        %v1534 = vpop.f32.mrf.mxu0
        %v1535 = vadd.f32 %v1462, %v1534
        %1536 = vmatmul.bf16.gmra.mxu0 %v652
        %v1537 = vpop.f32.mrf.mxu0
        %v1538 = vadd.f32 %v1465, %v1537
        %v1539 = vpop.f32.mrf.mxu0
        %v1540 = vadd.f32 %v1467, %v1539
        %1541 = vmatmul.bf16.gmra.mxu0 %v656
        %v1542 = vpop.f32.mrf.mxu0
        %v1543 = vadd.f32 %v1470, %v1542
        %v1544 = vpop.f32.mrf.mxu0
        %v1545 = vadd.f32 %v1472, %v1544
        %1546 = vmatmul.bf16.gmra.mxu0 %v660
        %v1547 = vpop.f32.mrf.mxu0
        %v1548 = vadd.f32 %v1475, %v1547
        %v1549 = vpop.f32.mrf.mxu0
        %v1550 = vadd.f32 %v1477, %v1549
        %1551 = vmatmul.bf16.gmra.mxu0 %v664
        %v1552 = vpop.f32.mrf.mxu0
        %v1553 = vadd.f32 %v1480, %v1552
        %v1554 = vpop.f32.mrf.mxu0
        %v1555 = vadd.f32 %v1482, %v1554
        %1556 = vmatmul.bf16.gmra.mxu0 %v668
        %v1557 = vpop.f32.mrf.mxu0
        %v1558 = vadd.f32 %v1485, %v1557
        %v1559 = vpop.f32.mrf.mxu0
        %v1560 = vadd.f32 %v1487, %v1559
        %1561 = vmatmul.bf16.gmra.mxu0 %v672
        %v1562 = vpop.f32.mrf.mxu0
        %v1563 = vadd.f32 %v1490, %v1562
        %v1564 = vpop.f32.mrf.mxu0
        %v1565 = vadd.f32 %v1492, %v1564
        %1566 = vmatmul.bf16.gmra.mxu0 %v676
        %v1567 = vpop.f32.mrf.mxu0
        %v1568 = vadd.f32 %v1495, %v1567
        %v1569 = vpop.f32.mrf.mxu0
        %v1570 = vadd.f32 %v1497, %v1569
        %1571 = vmatmul.bf16.gmra.mxu0 %v680
        %v1572 = vpop.f32.mrf.mxu0
        %v1573 = vadd.f32 %v1500, %v1572
        %v1574 = vpop.f32.mrf.mxu0
        %v1575 = vadd.f32 %v1502, %v1574
        %1576 = vmatmul.bf16.gmra.mxu0 %v684
        %v1577 = vpop.f32.mrf.mxu0
        %v1578 = vadd.f32 %v1505, %v1577
        %v1579 = vpop.f32.mrf.mxu0
        %1580 = vdwg.mxu0
        %1581 = vmatpush.bf16.msra.mxu0 %v1005
        %1582 = vmatpush.bf16.msra.mxu0 %v1003
        %1583 = vmatpush.bf16.msra.mxu0 %v1001
        %1584 = vmatpush.bf16.msra.mxu0 %v999
        %1585 = vmatpush.bf16.msra.mxu0 %v997
        %1586 = vmatpush.bf16.msra.mxu0 %v995
        %1587 = vmatpush.bf16.msra.mxu0 %v993
        %1588 = vmatpush.bf16.msra.mxu0 %v991
        %1589 = vmatmul.bf16.gmra.mxu0 %v637
        %v1590 = vpop.f32.mrf.mxu0
        %v1591 = vadd.f32 %v1518, %v1590
        %v1592 = vpop.f32.mrf.mxu0
        %v1593 = vadd.f32 %v1520, %v1592
        %1594 = vmatmul.bf16.gmra.mxu0 %v641
        %v1595 = vpop.f32.mrf.mxu0
        %v1596 = vadd.f32 %v1523, %v1595
        %v1597 = vpop.f32.mrf.mxu0
        %v1598 = vadd.f32 %v1525, %v1597
        %1599 = vmatmul.bf16.gmra.mxu0 %v645
        %v1600 = vpop.f32.mrf.mxu0
        %v1601 = vadd.f32 %v1528, %v1600
        %v1602 = vpop.f32.mrf.mxu0
        %v1603 = vadd.f32 %v1530, %v1602
        %1604 = vmatmul.bf16.gmra.mxu0 %v649
        %v1605 = vpop.f32.mrf.mxu0
        %v1606 = vadd.f32 %v1533, %v1605
        %v1607 = vpop.f32.mrf.mxu0
        %v1608 = vadd.f32 %v1535, %v1607
        %1609 = vmatmul.bf16.gmra.mxu0 %v653
        %v1610 = vpop.f32.mrf.mxu0
        %v1611 = vadd.f32 %v1538, %v1610
        %v1612 = vpop.f32.mrf.mxu0
        %v1613 = vadd.f32 %v1540, %v1612
        %1614 = vmatmul.bf16.gmra.mxu0 %v657
        %v1615 = vpop.f32.mrf.mxu0
        %v1616 = vadd.f32 %v1543, %v1615
        %v1617 = vpop.f32.mrf.mxu0
        %v1618 = vadd.f32 %v1545, %v1617
        %1619 = vmatmul.bf16.gmra.mxu0 %v661
        %v1620 = vpop.f32.mrf.mxu0
        %v1621 = vadd.f32 %v1548, %v1620
        %v1622 = vpop.f32.mrf.mxu0
        %v1623 = vadd.f32 %v1550, %v1622
        %1624 = vmatmul.bf16.gmra.mxu0 %v665
        %v1625 = vpop.f32.mrf.mxu0
        %v1626 = vadd.f32 %v1553, %v1625
        %v1627 = vpop.f32.mrf.mxu0
        %v1628 = vadd.f32 %v1555, %v1627
        %1629 = vmatmul.bf16.gmra.mxu0 %v669
        %v1630 = vpop.f32.mrf.mxu0
        %v1631 = vadd.f32 %v1558, %v1630
        %v1632 = vpop.f32.mrf.mxu0
        %v1633 = vadd.f32 %v1560, %v1632
        %1634 = vmatmul.bf16.gmra.mxu0 %v673
        %v1635 = vpop.f32.mrf.mxu0
        %v1636 = vadd.f32 %v1563, %v1635
        %v1637 = vpop.f32.mrf.mxu0
        %v1638 = vadd.f32 %v1565, %v1637
        %1639 = vmatmul.bf16.gmra.mxu0 %v677
        %v1640 = vpop.f32.mrf.mxu0
        %v1641 = vadd.f32 %v1568, %v1640
        %v1642 = vpop.f32.mrf.mxu0
        %v1643 = vadd.f32 %v1570, %v1642
        %1644 = vmatmul.bf16.gmra.mxu0 %v681
        %v1645 = vpop.f32.mrf.mxu0
        %v1646 = vadd.f32 %v1573, %v1645
        %v1647 = vpop.f32.mrf.mxu0
        %v1648 = vadd.f32 %v1575, %v1647
        %1649 = vmatmul.bf16.gmra.mxu0 %v685
        %v1650 = vpop.f32.mrf.mxu0
        %v1651 = vadd.f32 %v1578, %v1650
        %v1652 = vpop.f32.mrf.mxu0
        %1653 = vdwg.mxu0
        %v1654 = vadd.f32 %v1299, %v1301
        %v1655 = vadd.f32 %v1654, %v1304
        %v1656 = vadd.f32 %v1655, %v1306
        %v1657 = vadd.f32 %v1656, %v1309
        %v1658 = vadd.f32 %v1657, %v1311
        %v1659 = vadd.f32 %v1658, %v1314
        %v1660 = vadd.f32 %v1659, %v1316
        %v1661 = vadd.f32 %v1660, %v1319
        %v1662 = vadd.f32 %v1661, %v1321
        %v1663 = vadd.f32 %v1662, %v1324
        %v1664 = vadd.f32 %v1663, %v1326
        %v1665 = vadd.f32 %v1664, %v1329
        %v1666 = vadd.f32 %v1665, %v1331
        %v1667 = vadd.f32 %v1666, %v1334
        %v1668 = vadd.f32 %v1667, %v1336
        %v1669 = vadd.f32 %v1668, %v1339
        %v1670 = vadd.f32 %v1669, %v1341
        %v1671 = vadd.f32 %v1670, %v1344
        %v1672 = vadd.f32 %v1671, %v1346
        %v1673 = vadd.f32 %v1672, %v1349
        %v1674 = vadd.f32 %v1673, %v1351
        %v1675 = vadd.f32 %v1674, %v1354
        %v1676 = vadd.f32 %v1675, %v1356
        %vm1677 = vcmask 1043456
        %v1678 = vsel %vm1677, %v1359, 0.0
        %v1679 = vadd.f32 %v1676, %v1678
        %v1680 = vrot.slane %v1679, 4
        %v1681 = vadd.f32 %v1679, %v1680
        %v1682 = vrot.slane %v1681, 2
        %v1683 = vadd.f32 %v1681, %v1682
        %v1684 = vrot.slane %v1683, 1
        %v1685 = vadd.f32 %v1683, %v1684
        %v1686 = vadd.f32 %v1591, %v1593
        %v1687 = vadd.f32 %v1686, %v1596
        %v1688 = vadd.f32 %v1687, %v1598
        %v1689 = vadd.f32 %v1688, %v1601
        %v1690 = vadd.f32 %v1689, %v1603
        %v1691 = vadd.f32 %v1690, %v1606
        %v1692 = vadd.f32 %v1691, %v1608
        %v1693 = vadd.f32 %v1692, %v1611
        %v1694 = vadd.f32 %v1693, %v1613
        %v1695 = vadd.f32 %v1694, %v1616
        %v1696 = vadd.f32 %v1695, %v1618
        %v1697 = vadd.f32 %v1696, %v1621
        %v1698 = vadd.f32 %v1697, %v1623
        %v1699 = vadd.f32 %v1698, %v1626
        %v1700 = vadd.f32 %v1699, %v1628
        %v1701 = vadd.f32 %v1700, %v1631
        %v1702 = vadd.f32 %v1701, %v1633
        %v1703 = vadd.f32 %v1702, %v1636
        %v1704 = vadd.f32 %v1703, %v1638
        %v1705 = vadd.f32 %v1704, %v1641
        %v1706 = vadd.f32 %v1705, %v1643
        %v1707 = vadd.f32 %v1706, %v1646
        %v1708 = vadd.f32 %v1707, %v1648
        %v1709 = vsel %vm1677, %v1651, 0.0
        %v1710 = vadd.f32 %v1708, %v1709
        %v1711 = vrot.slane %v1710, 4
        %v1712 = vadd.f32 %v1710, %v1711
        %v1713 = vrot.slane %v1712, 2
        %v1714 = vadd.f32 %v1712, %v1713
        %v1715 = vrot.slane %v1714, 1
        %v1716 = vadd.f32 %v1714, %v1715
        %v1717 = vmul.f32 %v1685, 0.0051020407
        %v1718 = vmul.f32 %v1716, 0.0051020407
        %v1719 = vsub.f32 %v1299, %v1717
        %v1720 = vsub.f32 %v1591, %v1718
        %v1721 = vsub.f32 %v1301, %v1717
        %v1722 = vsub.f32 %v1593, %v1718
        %v1723 = vsub.f32 %v1304, %v1717
        %v1724 = vsub.f32 %v1596, %v1718
        %v1725 = vsub.f32 %v1306, %v1717
        %v1726 = vsub.f32 %v1598, %v1718
        %v1727 = vsub.f32 %v1309, %v1717
        %v1728 = vsub.f32 %v1601, %v1718
        %v1729 = vsub.f32 %v1311, %v1717
        %v1730 = vsub.f32 %v1603, %v1718
        %v1731 = vsub.f32 %v1314, %v1717
        %v1732 = vsub.f32 %v1606, %v1718
        %v1733 = vsub.f32 %v1316, %v1717
        %v1734 = vsub.f32 %v1608, %v1718
        %v1735 = vsub.f32 %v1319, %v1717
        %v1736 = vsub.f32 %v1611, %v1718
        %v1737 = vsub.f32 %v1321, %v1717
        %v1738 = vsub.f32 %v1613, %v1718
        %v1739 = vsub.f32 %v1324, %v1717
        %v1740 = vsub.f32 %v1616, %v1718
        %v1741 = vsub.f32 %v1326, %v1717
        %v1742 = vsub.f32 %v1618, %v1718
        %v1743 = vsub.f32 %v1329, %v1717
        %v1744 = vsub.f32 %v1621, %v1718
        %v1745 = vsub.f32 %v1331, %v1717
        %v1746 = vsub.f32 %v1623, %v1718
        %v1747 = vsub.f32 %v1334, %v1717
        %v1748 = vsub.f32 %v1626, %v1718
        %v1749 = vsub.f32 %v1336, %v1717
        %v1750 = vsub.f32 %v1628, %v1718
        %v1751 = vsub.f32 %v1339, %v1717
        %v1752 = vsub.f32 %v1631, %v1718
        %v1753 = vsub.f32 %v1341, %v1717
        %v1754 = vsub.f32 %v1633, %v1718
        %v1755 = vsub.f32 %v1344, %v1717
        %v1756 = vsub.f32 %v1636, %v1718
        %v1757 = vsub.f32 %v1346, %v1717
        %v1758 = vsub.f32 %v1638, %v1718
        %v1759 = vsub.f32 %v1349, %v1717
        %v1760 = vsub.f32 %v1641, %v1718
        %v1761 = vsub.f32 %v1351, %v1717
        %v1762 = vsub.f32 %v1643, %v1718
        %v1763 = vsub.f32 %v1354, %v1717
        %v1764 = vsub.f32 %v1646, %v1718
        %v1765 = vsub.f32 %v1356, %v1717
        %v1766 = vsub.f32 %v1648, %v1718
        %v1767 = vsub.f32 %v1359, %v1717
        %v1768 = vsub.f32 %v1651, %v1718
        %v1769 = vmul.f32 %v1719, %v1719
        %v1770 = vmul.f32 %v1720, %v1720
        %v1771 = vmul.f32 %v1721, %v1721
        %v1772 = vmul.f32 %v1722, %v1722
        %v1773 = vmul.f32 %v1723, %v1723
        %v1774 = vmul.f32 %v1724, %v1724
        %v1775 = vmul.f32 %v1725, %v1725
        %v1776 = vmul.f32 %v1726, %v1726
        %v1777 = vmul.f32 %v1727, %v1727
        %v1778 = vmul.f32 %v1728, %v1728
        %v1779 = vmul.f32 %v1729, %v1729
        %v1780 = vmul.f32 %v1730, %v1730
        %v1781 = vmul.f32 %v1731, %v1731
        %v1782 = vmul.f32 %v1732, %v1732
        %v1783 = vmul.f32 %v1733, %v1733
        %v1784 = vmul.f32 %v1734, %v1734
        %v1785 = vmul.f32 %v1735, %v1735
        %v1786 = vmul.f32 %v1736, %v1736
        %v1787 = vmul.f32 %v1737, %v1737
        %v1788 = vmul.f32 %v1738, %v1738
        %v1789 = vmul.f32 %v1739, %v1739
        %v1790 = vmul.f32 %v1740, %v1740
        %v1791 = vmul.f32 %v1741, %v1741
        %v1792 = vmul.f32 %v1742, %v1742
        %v1793 = vmul.f32 %v1743, %v1743
        %v1794 = vmul.f32 %v1744, %v1744
        %v1795 = vmul.f32 %v1745, %v1745
        %v1796 = vmul.f32 %v1746, %v1746
        %v1797 = vmul.f32 %v1747, %v1747
        %v1798 = vmul.f32 %v1748, %v1748
        %v1799 = vmul.f32 %v1749, %v1749
        %v1800 = vmul.f32 %v1750, %v1750
        %v1801 = vmul.f32 %v1751, %v1751
        %v1802 = vmul.f32 %v1752, %v1752
        %v1803 = vmul.f32 %v1753, %v1753
        %v1804 = vmul.f32 %v1754, %v1754
        %v1805 = vmul.f32 %v1755, %v1755
        %v1806 = vmul.f32 %v1756, %v1756
        %v1807 = vmul.f32 %v1757, %v1757
        %v1808 = vmul.f32 %v1758, %v1758
        %v1809 = vmul.f32 %v1759, %v1759
        %v1810 = vmul.f32 %v1760, %v1760
        %v1811 = vmul.f32 %v1761, %v1761
        %v1812 = vmul.f32 %v1762, %v1762
        %v1813 = vmul.f32 %v1763, %v1763
        %v1814 = vmul.f32 %v1764, %v1764
        %v1815 = vmul.f32 %v1765, %v1765
        %v1816 = vmul.f32 %v1766, %v1766
        %v1817 = vmul.f32 %v1767, %v1767
        %v1818 = vmul.f32 %v1768, %v1768
        %v1819 = vadd.f32 %v1769, %v1771
        %v1820 = vadd.f32 %v1819, %v1773
        %v1821 = vadd.f32 %v1820, %v1775
        %v1822 = vadd.f32 %v1821, %v1777
        %v1823 = vadd.f32 %v1822, %v1779
        %v1824 = vadd.f32 %v1823, %v1781
        %v1825 = vadd.f32 %v1824, %v1783
        %v1826 = vadd.f32 %v1825, %v1785
        %v1827 = vadd.f32 %v1826, %v1787
        %v1828 = vadd.f32 %v1827, %v1789
        %v1829 = vadd.f32 %v1828, %v1791
        %v1830 = vadd.f32 %v1829, %v1793
        %v1831 = vadd.f32 %v1830, %v1795
        %v1832 = vadd.f32 %v1831, %v1797
        %v1833 = vadd.f32 %v1832, %v1799
        %v1834 = vadd.f32 %v1833, %v1801
        %v1835 = vadd.f32 %v1834, %v1803
        %v1836 = vadd.f32 %v1835, %v1805
        %v1837 = vadd.f32 %v1836, %v1807
        %v1838 = vadd.f32 %v1837, %v1809
        %v1839 = vadd.f32 %v1838, %v1811
        %v1840 = vadd.f32 %v1839, %v1813
        %v1841 = vadd.f32 %v1840, %v1815
        %v1842 = vsel %vm1677, %v1817, 0.0
        %v1843 = vadd.f32 %v1841, %v1842
        %v1844 = vrot.slane %v1843, 4
        %v1845 = vadd.f32 %v1843, %v1844
        %v1846 = vrot.slane %v1845, 2
        %v1847 = vadd.f32 %v1845, %v1846
        %v1848 = vrot.slane %v1847, 1
        %v1849 = vadd.f32 %v1847, %v1848
        %v1850 = vadd.f32 %v1770, %v1772
        %v1851 = vadd.f32 %v1850, %v1774
        %v1852 = vadd.f32 %v1851, %v1776
        %v1853 = vadd.f32 %v1852, %v1778
        %v1854 = vadd.f32 %v1853, %v1780
        %v1855 = vadd.f32 %v1854, %v1782
        %v1856 = vadd.f32 %v1855, %v1784
        %v1857 = vadd.f32 %v1856, %v1786
        %v1858 = vadd.f32 %v1857, %v1788
        %v1859 = vadd.f32 %v1858, %v1790
        %v1860 = vadd.f32 %v1859, %v1792
        %v1861 = vadd.f32 %v1860, %v1794
        %v1862 = vadd.f32 %v1861, %v1796
        %v1863 = vadd.f32 %v1862, %v1798
        %v1864 = vadd.f32 %v1863, %v1800
        %v1865 = vadd.f32 %v1864, %v1802
        %v1866 = vadd.f32 %v1865, %v1804
        %v1867 = vadd.f32 %v1866, %v1806
        %v1868 = vadd.f32 %v1867, %v1808
        %v1869 = vadd.f32 %v1868, %v1810
        %v1870 = vadd.f32 %v1869, %v1812
        %v1871 = vadd.f32 %v1870, %v1814
        %v1872 = vadd.f32 %v1871, %v1816
        %v1873 = vsel %vm1677, %v1818, 0.0
        %v1874 = vadd.f32 %v1872, %v1873
        %v1875 = vrot.slane %v1874, 4
        %v1876 = vadd.f32 %v1874, %v1875
        %v1877 = vrot.slane %v1876, 2
        %v1878 = vadd.f32 %v1876, %v1877
        %v1879 = vrot.slane %v1878, 1
        %v1880 = vadd.f32 %v1878, %v1879
        %v1881 = vmul.f32 %v1849, 0.0051020407
        %v1882 = vmul.f32 %v1880, 0.0051020407
        %v1883 = vld [vmem:[%s415] sm:$0x3]
        %v1884 = vadd.f32 %v1881, 1e-05
        %v1885 = vadd.f32 %v1882, 1e-05
        %v1886 = vrsqrt.pop %v1884
        %v1887 = vmul.f32 %v1886, %v1884
        %v1888 = vmul.f32 %v1887, %v1886
        %v1889 = vmul.f32 0.5, %v1888
        %v1890 = vsub.f32 1.5, %v1889
        %v1891 = vmul.f32 %v1886, %v1890
        %vm1892 = vweird.f32 %v1884
        %vm1893 = vweird.f32 %v1886
        %vm1894 = vmor %vm1892, %vm1893
        %v1895 = vsel %vm1894, %v1886, %v1891
        %v1896 = vrsqrt.pop %v1885
        %v1897 = vmul.f32 %v1896, %v1885
        %v1898 = vmul.f32 %v1897, %v1896
        %v1899 = vmul.f32 0.5, %v1898
        %v1900 = vsub.f32 1.5, %v1899
        %v1901 = vmul.f32 %v1896, %v1900
        %vm1902 = vweird.f32 %v1885
        %vm1903 = vweird.f32 %v1896
        %vm1904 = vmor %vm1902, %vm1903
        %v1905 = vsel %vm1904, %v1896, %v1901
        %v1908 = vrot.slane %v1905, 7
        %vm1909 = vcmask 1040384
        %v1910 = vsel %vm1909, %v1895, %v1908
        %v1912 = vmul.f32 %v1883, %v1910
        %v1913 = vld [vmem:[%s368] sm:$0xff]
        %v1914 = vld [vmem:[%s368 + $0x8] sm:$0xff]
        %v1915 = vld [vmem:[%s368 + $0x10] sm:$0xff]
        %v1916 = vld [vmem:[%s368 + $0x18] sm:$0xff]
        %v1917 = vld [vmem:[%s368 + $0x20] sm:$0xff]
        %v1918 = vld [vmem:[%s368 + $0x28] sm:$0xff]
        %v1919 = vld [vmem:[%s368 + $0x30] sm:$0xff]
        %v1920 = vld [vmem:[%s368 + $0x38] sm:$0xff]
        %v1921 = vld [vmem:[%s368 + $0x40] sm:$0xff]
        %v1922 = vld [vmem:[%s368 + $0x48] sm:$0xff]
        %v1923 = vld [vmem:[%s368 + $0x50] sm:$0xff]
        %v1924 = vld [vmem:[%s368 + $0x58] sm:$0xff]
        %v1925 = vld [vmem:[%s368 + $0x60] sm:$0xff]
        %v1926 = vld [vmem:[%s368 + $0x68] sm:$0xff]
        %v1927 = vld [vmem:[%s368 + $0x70] sm:$0xff]
        %v1928 = vld [vmem:[%s368 + $0x78] sm:$0xff]
        %v1929 = vld [vmem:[%s368 + $0x80] sm:$0xff]
        %v1930 = vld [vmem:[%s368 + $0x88] sm:$0xff]
        %v1931 = vld [vmem:[%s368 + $0x90] sm:$0xff]
        %v1932 = vld [vmem:[%s368 + $0x98] sm:$0xff]
        %v1933 = vld [vmem:[%s368 + $0xa0] sm:$0xff]
        %v1934 = vld [vmem:[%s368 + $0xa8] sm:$0xff]
        %v1935 = vld [vmem:[%s368 + $0xb0] sm:$0xff]
        %v1936 = vld [vmem:[%s368 + $0xb8] sm:$0xff]
        %v1937 = vld [vmem:[%s368 + $0xc0] sm:$0xff]
        %v1938 = vld [vmem:[%s368 + $0xc8] sm:$0xff]
        %v1939 = vld [vmem:[%s368 + $0xd0] sm:$0xff]
        %v1940 = vld [vmem:[%s368 + $0xd8] sm:$0xff]
        %v1941 = vld [vmem:[%s368 + $0xe0] sm:$0xff]
        %v1942 = vld [vmem:[%s368 + $0xe8] sm:$0xff]
        %v1943 = vld [vmem:[%s368 + $0xf0] sm:$0xff]
        %v1944 = vld [vmem:[%s368 + $0xf8] sm:$0xff]
        %v1945 = vld [vmem:[%s368 + $0x100] sm:$0xff]
        %v1946 = vld [vmem:[%s368 + $0x108] sm:$0xff]
        %v1947 = vld [vmem:[%s368 + $0x110] sm:$0xff]
        %v1948 = vld [vmem:[%s368 + $0x118] sm:$0xff]
        %v1949 = vld [vmem:[%s368 + $0x120] sm:$0xff]
        %v1950 = vld [vmem:[%s368 + $0x128] sm:$0xff]
        %v1951 = vld [vmem:[%s368 + $0x130] sm:$0xff]
        %v1952 = vld [vmem:[%s368 + $0x138] sm:$0xff]
        %v1953 = vld [vmem:[%s368 + $0x140] sm:$0xff]
        %v1954 = vld [vmem:[%s368 + $0x148] sm:$0xff]
        %v1955 = vld [vmem:[%s368 + $0x150] sm:$0xff]
        %v1956 = vld [vmem:[%s368 + $0x158] sm:$0xff]
        %v1957 = vld [vmem:[%s368 + $0x160] sm:$0xff]
        %v1958 = vld [vmem:[%s368 + $0x168] sm:$0xff]
        %v1959 = vld [vmem:[%s368 + $0x170] sm:$0xff]
        %v1960 = vld [vmem:[%s368 + $0x178] sm:$0xff]
        %v1961 = vld [vmem:[%s368 + $0x180] sm:$0xf]
        %v1962 = vld [vmem:[%s368 + $0x188] sm:$0xf]
        %v1964 = vperm.slane %v1912, 0
        %v1965 = vperm.slane %v1912, 1
        %v1968 = vmul.f32 %v1719, %v1964
        %v1969 = vmul.f32 %v1720, %v1965
        %v1970 = vmul.f32 %v1721, %v1964
        %v1971 = vmul.f32 %v1722, %v1965
        %v1972 = vmul.f32 %v1723, %v1964
        %v1973 = vmul.f32 %v1724, %v1965
        %v1974 = vmul.f32 %v1725, %v1964
        %v1975 = vmul.f32 %v1726, %v1965
        %v1976 = vmul.f32 %v1727, %v1964
        %v1977 = vmul.f32 %v1728, %v1965
        %v1978 = vmul.f32 %v1729, %v1964
        %v1979 = vmul.f32 %v1730, %v1965
        %v1980 = vmul.f32 %v1731, %v1964
        %v1981 = vmul.f32 %v1732, %v1965
        %v1982 = vmul.f32 %v1733, %v1964
        %v1983 = vmul.f32 %v1734, %v1965
        %v1984 = vmul.f32 %v1735, %v1964
        %v1985 = vmul.f32 %v1736, %v1965
        %v1986 = vmul.f32 %v1737, %v1964
        %v1987 = vmul.f32 %v1738, %v1965
        %v1988 = vmul.f32 %v1739, %v1964
        %v1989 = vmul.f32 %v1740, %v1965
        %v1990 = vmul.f32 %v1741, %v1964
        %v1991 = vmul.f32 %v1742, %v1965
        %v1992 = vmul.f32 %v1743, %v1964
        %v1993 = vmul.f32 %v1744, %v1965
        %v1994 = vmul.f32 %v1745, %v1964
        %v1995 = vmul.f32 %v1746, %v1965
        %v1996 = vmul.f32 %v1747, %v1964
        %v1997 = vmul.f32 %v1748, %v1965
        %v1998 = vmul.f32 %v1749, %v1964
        %v1999 = vmul.f32 %v1750, %v1965
        %v2000 = vmul.f32 %v1751, %v1964
        %v2001 = vmul.f32 %v1752, %v1965
        %v2002 = vmul.f32 %v1753, %v1964
        %v2003 = vmul.f32 %v1754, %v1965
        %v2004 = vmul.f32 %v1755, %v1964
        %v2005 = vmul.f32 %v1756, %v1965
        %v2006 = vmul.f32 %v1757, %v1964
        %v2007 = vmul.f32 %v1758, %v1965
        %v2008 = vmul.f32 %v1759, %v1964
        %v2009 = vmul.f32 %v1760, %v1965
        %v2010 = vmul.f32 %v1761, %v1964
        %v2011 = vmul.f32 %v1762, %v1965
        %v2012 = vmul.f32 %v1763, %v1964
        %v2013 = vmul.f32 %v1764, %v1965
        %v2014 = vmul.f32 %v1765, %v1964
        %v2015 = vmul.f32 %v1766, %v1965
        %v2016 = vmul.f32 %v1767, %v1964
        %v2017 = vmul.f32 %v1768, %v1965
        %v2018 = vadd.f32 %v1913, %v1968
        %v2019 = vadd.f32 %v1914, %v1969
        %v2020 = vadd.f32 %v1915, %v1970
        %v2021 = vadd.f32 %v1916, %v1971
        %v2022 = vadd.f32 %v1917, %v1972
        %v2023 = vadd.f32 %v1918, %v1973
        %v2024 = vadd.f32 %v1919, %v1974
        %v2025 = vadd.f32 %v1920, %v1975
        %v2026 = vadd.f32 %v1921, %v1976
        %v2027 = vadd.f32 %v1922, %v1977
        %v2028 = vadd.f32 %v1923, %v1978
        %v2029 = vadd.f32 %v1924, %v1979
        %v2030 = vadd.f32 %v1925, %v1980
        %v2031 = vadd.f32 %v1926, %v1981
        %v2032 = vadd.f32 %v1927, %v1982
        %v2033 = vadd.f32 %v1928, %v1983
        %v2034 = vadd.f32 %v1929, %v1984
        %v2035 = vadd.f32 %v1930, %v1985
        %v2036 = vadd.f32 %v1931, %v1986
        %v2037 = vadd.f32 %v1932, %v1987
        %v2038 = vadd.f32 %v1933, %v1988
        %v2039 = vadd.f32 %v1934, %v1989
        %v2040 = vadd.f32 %v1935, %v1990
        %v2041 = vadd.f32 %v1936, %v1991
        %v2042 = vadd.f32 %v1937, %v1992
        %v2043 = vadd.f32 %v1938, %v1993
        %v2044 = vadd.f32 %v1939, %v1994
        %v2045 = vadd.f32 %v1940, %v1995
        %v2046 = vadd.f32 %v1941, %v1996
        %v2047 = vadd.f32 %v1942, %v1997
        %v2048 = vadd.f32 %v1943, %v1998
        %v2049 = vadd.f32 %v1944, %v1999
        %v2050 = vadd.f32 %v1945, %v2000
        %v2051 = vadd.f32 %v1946, %v2001
        %v2052 = vadd.f32 %v1947, %v2002
        %v2053 = vadd.f32 %v1948, %v2003
        %v2054 = vadd.f32 %v1949, %v2004
        %v2055 = vadd.f32 %v1950, %v2005
        %v2056 = vadd.f32 %v1951, %v2006
        %v2057 = vadd.f32 %v1952, %v2007
        %v2058 = vadd.f32 %v1953, %v2008
        %v2059 = vadd.f32 %v1954, %v2009
        %v2060 = vadd.f32 %v1955, %v2010
        %v2061 = vadd.f32 %v1956, %v2011
        %v2062 = vadd.f32 %v1957, %v2012
        %v2063 = vadd.f32 %v1958, %v2013
        %v2064 = vadd.f32 %v1959, %v2014
        %v2065 = vadd.f32 %v1960, %v2015
        %v2066 = vadd.f32 %v1961, %v2016
        %v2067 = vadd.f32 %v1962, %v2017
        %v2068 = vld [vmem:[%s420] sm:$0x3]
        %v2070 = vperm.slane %v2068, 0
        %v2071 = vperm.slane %v2068, 1
        %v2074 = vadd.f32 %v2018, %v2070
        %v2075 = vadd.f32 %v2019, %v2071
        %v2076 = vadd.f32 %v2020, %v2070
        %v2077 = vadd.f32 %v2021, %v2071
        %v2078 = vadd.f32 %v2022, %v2070
        %v2079 = vadd.f32 %v2023, %v2071
        %v2080 = vadd.f32 %v2024, %v2070
        %v2081 = vadd.f32 %v2025, %v2071
        %v2082 = vadd.f32 %v2026, %v2070
        %v2083 = vadd.f32 %v2027, %v2071
        %v2084 = vadd.f32 %v2028, %v2070
        %v2085 = vadd.f32 %v2029, %v2071
        %v2086 = vadd.f32 %v2030, %v2070
        %v2087 = vadd.f32 %v2031, %v2071
        %v2088 = vadd.f32 %v2032, %v2070
        %v2089 = vadd.f32 %v2033, %v2071
        %v2090 = vadd.f32 %v2034, %v2070
        %v2091 = vadd.f32 %v2035, %v2071
        %v2092 = vadd.f32 %v2036, %v2070
        %v2093 = vadd.f32 %v2037, %v2071
        %v2094 = vadd.f32 %v2038, %v2070
        %v2095 = vadd.f32 %v2039, %v2071
        %v2096 = vadd.f32 %v2040, %v2070
        %v2097 = vadd.f32 %v2041, %v2071
        %v2098 = vadd.f32 %v2042, %v2070
        %v2099 = vadd.f32 %v2043, %v2071
        %v2100 = vadd.f32 %v2044, %v2070
        %v2101 = vadd.f32 %v2045, %v2071
        %v2102 = vadd.f32 %v2046, %v2070
        %v2103 = vadd.f32 %v2047, %v2071
        %v2104 = vadd.f32 %v2048, %v2070
        %v2105 = vadd.f32 %v2049, %v2071
        %v2106 = vadd.f32 %v2050, %v2070
        %v2107 = vadd.f32 %v2051, %v2071
        %v2108 = vadd.f32 %v2052, %v2070
        %v2109 = vadd.f32 %v2053, %v2071
        %v2110 = vadd.f32 %v2054, %v2070
        %v2111 = vadd.f32 %v2055, %v2071
        %v2112 = vadd.f32 %v2056, %v2070
        %v2113 = vadd.f32 %v2057, %v2071
        %v2114 = vadd.f32 %v2058, %v2070
        %v2115 = vadd.f32 %v2059, %v2071
        %v2116 = vadd.f32 %v2060, %v2070
        %v2117 = vadd.f32 %v2061, %v2071
        %v2118 = vadd.f32 %v2062, %v2070
        %v2119 = vadd.f32 %v2063, %v2071
        %v2120 = vadd.f32 %v2064, %v2070
        %v2121 = vadd.f32 %v2065, %v2071
        %v2122 = vadd.f32 %v2066, %v2070
        %v2123 = vadd.f32 %v2067, %v2071
        %v2124 = vmax.f32 %v2074, 0.0
        %v2125 = vmax.f32 %v2075, 0.0
        %v2126 = vmax.f32 %v2076, 0.0
        %v2127 = vmax.f32 %v2077, 0.0
        %v2128 = vmax.f32 %v2078, 0.0
        %v2129 = vmax.f32 %v2079, 0.0
        %v2130 = vmax.f32 %v2080, 0.0
        %v2131 = vmax.f32 %v2081, 0.0
        %v2132 = vmax.f32 %v2082, 0.0
        %v2133 = vmax.f32 %v2083, 0.0
        %v2134 = vmax.f32 %v2084, 0.0
        %v2135 = vmax.f32 %v2085, 0.0
        %v2136 = vmax.f32 %v2086, 0.0
        %v2137 = vmax.f32 %v2087, 0.0
        %v2138 = vmax.f32 %v2088, 0.0
        %v2139 = vmax.f32 %v2089, 0.0
        %v2140 = vmax.f32 %v2090, 0.0
        %v2141 = vmax.f32 %v2091, 0.0
        %v2142 = vmax.f32 %v2092, 0.0
        %v2143 = vmax.f32 %v2093, 0.0
        %v2144 = vmax.f32 %v2094, 0.0
        %v2145 = vmax.f32 %v2095, 0.0
        %v2146 = vmax.f32 %v2096, 0.0
        %v2147 = vmax.f32 %v2097, 0.0
        %v2148 = vmax.f32 %v2098, 0.0
        %v2149 = vmax.f32 %v2099, 0.0
        %v2150 = vmax.f32 %v2100, 0.0
        %v2151 = vmax.f32 %v2101, 0.0
        %v2152 = vmax.f32 %v2102, 0.0
        %v2153 = vmax.f32 %v2103, 0.0
        %v2154 = vmax.f32 %v2104, 0.0
        %v2155 = vmax.f32 %v2105, 0.0
        %v2156 = vmax.f32 %v2106, 0.0
        %v2157 = vmax.f32 %v2107, 0.0
        %v2158 = vmax.f32 %v2108, 0.0
        %v2159 = vmax.f32 %v2109, 0.0
        %v2160 = vmax.f32 %v2110, 0.0
        %v2161 = vmax.f32 %v2111, 0.0
        %v2162 = vmax.f32 %v2112, 0.0
        %v2163 = vmax.f32 %v2113, 0.0
        %v2164 = vmax.f32 %v2114, 0.0
        %v2165 = vmax.f32 %v2115, 0.0
        %v2166 = vmax.f32 %v2116, 0.0
        %v2167 = vmax.f32 %v2117, 0.0
        %v2168 = vmax.f32 %v2118, 0.0
        %v2169 = vmax.f32 %v2119, 0.0
        %v2170 = vmax.f32 %v2120, 0.0
        %v2171 = vmax.f32 %v2121, 0.0
        %v2172 = vmax.f32 %v2122, 0.0
        %v2173 = vmax.f32 %v2123, 0.0
        %2174 = vst [vmem:[%s406] sm:$0xff] %v2124
        %2175 = vst [vmem:[%s406 + $0x8] sm:$0xff] %v2125
        %2176 = vst [vmem:[%s406 + $0x10] sm:$0xff] %v2126
        %2177 = vst [vmem:[%s406 + $0x18] sm:$0xff] %v2127
        %2178 = vst [vmem:[%s406 + $0x20] sm:$0xff] %v2128
        %2179 = vst [vmem:[%s406 + $0x28] sm:$0xff] %v2129
        %2180 = vst [vmem:[%s406 + $0x30] sm:$0xff] %v2130
        %2181 = vst [vmem:[%s406 + $0x38] sm:$0xff] %v2131
        %2182 = vst [vmem:[%s406 + $0x40] sm:$0xff] %v2132
        %2183 = vst [vmem:[%s406 + $0x48] sm:$0xff] %v2133
        %2184 = vst [vmem:[%s406 + $0x50] sm:$0xff] %v2134
        %2185 = vst [vmem:[%s406 + $0x58] sm:$0xff] %v2135
        %2186 = vst [vmem:[%s406 + $0x60] sm:$0xff] %v2136
        %2187 = vst [vmem:[%s406 + $0x68] sm:$0xff] %v2137
        %2188 = vst [vmem:[%s406 + $0x70] sm:$0xff] %v2138
        %2189 = vst [vmem:[%s406 + $0x78] sm:$0xff] %v2139
        %2190 = vst [vmem:[%s406 + $0x80] sm:$0xff] %v2140
        %2191 = vst [vmem:[%s406 + $0x88] sm:$0xff] %v2141
        %2192 = vst [vmem:[%s406 + $0x90] sm:$0xff] %v2142
        %2193 = vst [vmem:[%s406 + $0x98] sm:$0xff] %v2143
        %2194 = vst [vmem:[%s406 + $0xa0] sm:$0xff] %v2144
        %2195 = vst [vmem:[%s406 + $0xa8] sm:$0xff] %v2145
        %2196 = vst [vmem:[%s406 + $0xb0] sm:$0xff] %v2146
        %2197 = vst [vmem:[%s406 + $0xb8] sm:$0xff] %v2147
        %2198 = vst [vmem:[%s406 + $0xc0] sm:$0xff] %v2148
        %2199 = vst [vmem:[%s406 + $0xc8] sm:$0xff] %v2149
        %2200 = vst [vmem:[%s406 + $0xd0] sm:$0xff] %v2150
        %2201 = vst [vmem:[%s406 + $0xd8] sm:$0xff] %v2151
        %2202 = vst [vmem:[%s406 + $0xe0] sm:$0xff] %v2152
        %2203 = vst [vmem:[%s406 + $0xe8] sm:$0xff] %v2153
        %2204 = vst [vmem:[%s406 + $0xf0] sm:$0xff] %v2154
        %2205 = vst [vmem:[%s406 + $0xf8] sm:$0xff] %v2155
        %2206 = vst [vmem:[%s406 + $0x100] sm:$0xff] %v2156
        %2207 = vst [vmem:[%s406 + $0x108] sm:$0xff] %v2157
        %2208 = vst [vmem:[%s406 + $0x110] sm:$0xff] %v2158
        %2209 = vst [vmem:[%s406 + $0x118] sm:$0xff] %v2159
        %2210 = vst [vmem:[%s406 + $0x120] sm:$0xff] %v2160
        %2211 = vst [vmem:[%s406 + $0x128] sm:$0xff] %v2161
        %2212 = vst [vmem:[%s406 + $0x130] sm:$0xff] %v2162
        %2213 = vst [vmem:[%s406 + $0x138] sm:$0xff] %v2163
        %2214 = vst [vmem:[%s406 + $0x140] sm:$0xff] %v2164
        %2215 = vst [vmem:[%s406 + $0x148] sm:$0xff] %v2165
        %2216 = vst [vmem:[%s406 + $0x150] sm:$0xff] %v2166
        %2217 = vst [vmem:[%s406 + $0x158] sm:$0xff] %v2167
        %2218 = vst [vmem:[%s406 + $0x160] sm:$0xff] %v2168
        %2219 = vst [vmem:[%s406 + $0x168] sm:$0xff] %v2169
        %2220 = vst [vmem:[%s406 + $0x170] sm:$0xff] %v2170
        %2221 = vst [vmem:[%s406 + $0x178] sm:$0xff] %v2171
        %2222 = vst [vmem:[%s406 + $0x180] sm:$0xf] %v2172
        %2223 = vst [vmem:[%s406 + $0x188] sm:$0xf] %v2173
        %s2224 = sand.u32 %s171, 1
        %s2225 = sand.u32 %s171, 1
        %s2226 = smul.addr %s2225, 400
        %s2227 = scalar_lea.vmem [#allocation3], %s2226
        // Predicated region
        $region68: #{fused_forward.1} parent=62 // pred_check
          %p2228 = pneg %p181
        $region69: #{fused_forward.1} parent=62 // pred_check_branch
          %2230 = sbr.rel (%p2228) target = $region71
        $region70: #{fused_forward.1} parent=62 // pred_region
          %s2231 = smul.u32 2, %s17
          %s2232 = smul.addr %s2231, 8
          %s2233 = scalar_lea.vmem %s6, %s2232
          // Predicated region
          $region72: #{fused_forward.1} parent=70 // pred_check
            _
          $region73: #{fused_forward.1} parent=70 // pred_check_branch
            %2235 = sbr.rel (0) target = $region75
          $region74: #{fused_forward.1} parent=70 // pred_region
            // Predicated region
            $region76: #{fused_forward.1} parent=74 // pred_check
              _
            $region77: #{fused_forward.1} parent=74 // pred_check_branch
              %2237 = sbr.rel (0) target = $region79
            $region78: #{fused_forward.1} parent=74 // pred_region
              loop: start=0, step=1, limit=1
              $region80: #{fused_forward.1} parent=78 // loop_pre_header
                _
              $region81: #{fused_forward.1} parent=78 // loop_header
                %s2239 = sphi 0, %s2243
                %p2240 = scmp.ge.s32.totalorder %s2239, 1
                %s2244 = sphi %s2227, %s2227
                %s2245 = sphi %s2233, %s2233
              $region82: #{fused_forward.1} parent=78 // loop_header_branch
                %2242 = sbr.rel (%p2240) target = $region86
              $region83: #{fused_forward.1} parent=78 // loop_body
                %v2246 = vld [vmem:[%s2244] sm:$0xff]
                %2247 = vst [vmem:[%s2245] sm:$0xff] %v2246
                %v2248 = vld [vmem:[%s2244 + $0x8] sm:$0xff]
                %2249 = vst [vmem:[%s2245 + $0x8] sm:$0xff] %v2248
                %v2250 = vld [vmem:[%s2244 + $0x10] sm:$0xff]
                %2251 = vst [vmem:[%s2245 + $0x20] sm:$0xff] %v2250
                %v2252 = vld [vmem:[%s2244 + $0x18] sm:$0xff]
                %2253 = vst [vmem:[%s2245 + $0x28] sm:$0xff] %v2252
                %v2254 = vld [vmem:[%s2244 + $0x20] sm:$0xff]
                %2255 = vst [vmem:[%s2245 + $0x40] sm:$0xff] %v2254
                %v2256 = vld [vmem:[%s2244 + $0x28] sm:$0xff]
                %2257 = vst [vmem:[%s2245 + $0x48] sm:$0xff] %v2256
                %v2258 = vld [vmem:[%s2244 + $0x30] sm:$0xff]
                %2259 = vst [vmem:[%s2245 + $0x60] sm:$0xff] %v2258
                %v2260 = vld [vmem:[%s2244 + $0x38] sm:$0xff]
                %2261 = vst [vmem:[%s2245 + $0x68] sm:$0xff] %v2260
                %v2262 = vld [vmem:[%s2244 + $0x40] sm:$0xff]
                %2263 = vst [vmem:[%s2245 + $0x80] sm:$0xff] %v2262
                %v2264 = vld [vmem:[%s2244 + $0x48] sm:$0xff]
                %2265 = vst [vmem:[%s2245 + $0x88] sm:$0xff] %v2264
                %v2266 = vld [vmem:[%s2244 + $0x50] sm:$0xff]
                %2267 = vst [vmem:[%s2245 + $0xa0] sm:$0xff] %v2266
                %v2268 = vld [vmem:[%s2244 + $0x58] sm:$0xff]
                %2269 = vst [vmem:[%s2245 + $0xa8] sm:$0xff] %v2268
                %v2270 = vld [vmem:[%s2244 + $0x60] sm:$0xff]
                %2271 = vst [vmem:[%s2245 + $0xc0] sm:$0xff] %v2270
                %v2272 = vld [vmem:[%s2244 + $0x68] sm:$0xff]
                %2273 = vst [vmem:[%s2245 + $0xc8] sm:$0xff] %v2272
                %v2274 = vld [vmem:[%s2244 + $0x70] sm:$0xff]
                %2275 = vst [vmem:[%s2245 + $0xe0] sm:$0xff] %v2274
                %v2276 = vld [vmem:[%s2244 + $0x78] sm:$0xff]
                %2277 = vst [vmem:[%s2245 + $0xe8] sm:$0xff] %v2276
                %v2278 = vld [vmem:[%s2244 + $0x80] sm:$0xff]
                %2279 = vst [vmem:[%s2245 + $0x100] sm:$0xff] %v2278
                %v2280 = vld [vmem:[%s2244 + $0x88] sm:$0xff]
                %2281 = vst [vmem:[%s2245 + $0x108] sm:$0xff] %v2280
                %v2282 = vld [vmem:[%s2244 + $0x90] sm:$0xff]
                %2283 = vst [vmem:[%s2245 + $0x120] sm:$0xff] %v2282
                %v2284 = vld [vmem:[%s2244 + $0x98] sm:$0xff]
                %2285 = vst [vmem:[%s2245 + $0x128] sm:$0xff] %v2284
                %v2286 = vld [vmem:[%s2244 + $0xa0] sm:$0xff]
                %2287 = vst [vmem:[%s2245 + $0x140] sm:$0xff] %v2286
                %v2288 = vld [vmem:[%s2244 + $0xa8] sm:$0xff]
                %2289 = vst [vmem:[%s2245 + $0x148] sm:$0xff] %v2288
                %v2290 = vld [vmem:[%s2244 + $0xb0] sm:$0xff]
                %2291 = vst [vmem:[%s2245 + $0x160] sm:$0xff] %v2290
                %v2292 = vld [vmem:[%s2244 + $0xb8] sm:$0xff]
                %2293 = vst [vmem:[%s2245 + $0x168] sm:$0xff] %v2292
                %v2294 = vld [vmem:[%s2244 + $0xc0] sm:$0xff]
                %2295 = vst [vmem:[%s2245 + $0x180] sm:$0xff] %v2294
                %v2296 = vld [vmem:[%s2244 + $0xc8] sm:$0xff]
                %2297 = vst [vmem:[%s2245 + $0x188] sm:$0xff] %v2296
                %v2298 = vld [vmem:[%s2244 + $0xd0] sm:$0xff]
                %2299 = vst [vmem:[%s2245 + $0x1a0] sm:$0xff] %v2298
                %v2300 = vld [vmem:[%s2244 + $0xd8] sm:$0xff]
                %2301 = vst [vmem:[%s2245 + $0x1a8] sm:$0xff] %v2300
                %v2302 = vld [vmem:[%s2244 + $0xe0] sm:$0xff]
                %2303 = vst [vmem:[%s2245 + $0x1c0] sm:$0xff] %v2302
                %v2304 = vld [vmem:[%s2244 + $0xe8] sm:$0xff]
                %2305 = vst [vmem:[%s2245 + $0x1c8] sm:$0xff] %v2304
                %v2306 = vld [vmem:[%s2244 + $0xf0] sm:$0xff]
                %2307 = vst [vmem:[%s2245 + $0x1e0] sm:$0xff] %v2306
                %v2308 = vld [vmem:[%s2244 + $0xf8] sm:$0xff]
                %2309 = vst [vmem:[%s2245 + $0x1e8] sm:$0xff] %v2308
                %v2310 = vld [vmem:[%s2244 + $0x100] sm:$0xff]
                %2311 = vst [vmem:[%s2245 + $0x200] sm:$0xff] %v2310
                %v2312 = vld [vmem:[%s2244 + $0x108] sm:$0xff]
                %2313 = vst [vmem:[%s2245 + $0x208] sm:$0xff] %v2312
                %v2314 = vld [vmem:[%s2244 + $0x110] sm:$0xff]
                %2315 = vst [vmem:[%s2245 + $0x220] sm:$0xff] %v2314
                %v2316 = vld [vmem:[%s2244 + $0x118] sm:$0xff]
                %2317 = vst [vmem:[%s2245 + $0x228] sm:$0xff] %v2316
                %v2318 = vld [vmem:[%s2244 + $0x120] sm:$0xff]
                %2319 = vst [vmem:[%s2245 + $0x240] sm:$0xff] %v2318
                %v2320 = vld [vmem:[%s2244 + $0x128] sm:$0xff]
                %2321 = vst [vmem:[%s2245 + $0x248] sm:$0xff] %v2320
                %v2322 = vld [vmem:[%s2244 + $0x130] sm:$0xff]
                %2323 = vst [vmem:[%s2245 + $0x260] sm:$0xff] %v2322
                %v2324 = vld [vmem:[%s2244 + $0x138] sm:$0xff]
                %2325 = vst [vmem:[%s2245 + $0x268] sm:$0xff] %v2324
                %v2326 = vld [vmem:[%s2244 + $0x140] sm:$0xff]
                %2327 = vst [vmem:[%s2245 + $0x280] sm:$0xff] %v2326
                %v2328 = vld [vmem:[%s2244 + $0x148] sm:$0xff]
                %2329 = vst [vmem:[%s2245 + $0x288] sm:$0xff] %v2328
                %v2330 = vld [vmem:[%s2244 + $0x150] sm:$0xff]
                %2331 = vst [vmem:[%s2245 + $0x2a0] sm:$0xff] %v2330
                %v2332 = vld [vmem:[%s2244 + $0x158] sm:$0xff]
                %2333 = vst [vmem:[%s2245 + $0x2a8] sm:$0xff] %v2332
                %v2334 = vld [vmem:[%s2244 + $0x160] sm:$0xff]
                %2335 = vst [vmem:[%s2245 + $0x2c0] sm:$0xff] %v2334
                %v2336 = vld [vmem:[%s2244 + $0x168] sm:$0xff]
                %2337 = vst [vmem:[%s2245 + $0x2c8] sm:$0xff] %v2336
                %v2338 = vld [vmem:[%s2244 + $0x170] sm:$0xff]
                %2339 = vst [vmem:[%s2245 + $0x2e0] sm:$0xff] %v2338
                %v2340 = vld [vmem:[%s2244 + $0x178] sm:$0xff]
                %2341 = vst [vmem:[%s2245 + $0x2e8] sm:$0xff] %v2340
                %v2342 = vld [vmem:[%s2244 + $0x180] sm:$0xff]
                %2343 = vst [vmem:[%s2245 + $0x300] sm:$0xff] %v2342
                %v2344 = vld [vmem:[%s2244 + $0x188] sm:$0xff]
                %2345 = vst [vmem:[%s2245 + $0x308] sm:$0xff] %v2344
              $region84: #{fused_forward.1} parent=78 // loop_footer
                %s2243 = sadd.s32 1, %s2239
              $region85: #{fused_forward.1} parent=78 // loop_footer_branch
                %2238 = sbr.rel target = $region81
              $region86: #{fused_forward.1} parent=78 // loop_exit
                _
            $region79: #{fused_forward.1} parent=74 // pred_fallthru
              _
            // Predicated region
            $region87: #{fused_forward.1} parent=74 // pred_check
              _
            $region88: #{fused_forward.1} parent=74 // pred_check_branch
              %2347 = sbr.rel target = $region90
            $region89: #{fused_forward.1} parent=74 // pred_region
              _
            $region90: #{fused_forward.1} parent=74 // pred_fallthru
              _
          $region75: #{fused_forward.1} parent=70 // pred_fallthru
            _
          %2348 = vnop
        $region71: #{fused_forward.1} parent=62 // pred_fallthru
          _
      $region63: #{fused_forward.1} parent=5 // pred_fallthru
        _
      %p2349 = scmp.le.s32.totalorder 2, %s12
      // Predicated region
      $region91: #{fused_forward.1} parent=5 // pred_check
        %p2350 = pneg %p2349
      $region92: #{fused_forward.1} parent=5 // pred_check_branch
        %2352 = sbr.rel (%p2350) target = $region94
      $region93: #{fused_forward.1} parent=5 // pred_region
        %s2353 = ssub.s32 %s12, 2
        // Predicated region
        $region95: #{fused_forward.1} parent=93 // pred_check
          %p2354 = pneg %p187
        $region96: #{fused_forward.1} parent=93 // pred_check_branch
          %2356 = sbr.rel (%p2354) target = $region98
        $region97: #{fused_forward.1} parent=93 // pred_region
          %s2357 = sand.u32 %s172, 1
          %s2358 = sand.u32 %s172, 1
          %s2359 = smul.addr %s2358, 400
          %s2360 = scalar_lea.vmem [#allocation3], %s2359
        $region98: #{fused_forward.1} parent=93 // pred_fallthru
          _
      $region94: #{fused_forward.1} parent=5 // pred_fallthru
        _
    $region6: #{fused_forward.1} parent=1 // loop_footer
      %s16 = sadd.s32 1, %s12
    $region7: #{fused_forward.1} parent=1 // loop_footer_branch
      %11 = sbr.rel target = $region3
    $region8: #{fused_forward.1} parent=1 // loop_exit
      _

</llo_original>
